<compile_context>
chip_gen: v7x
topology: tpu7x:2x2x1
jax: 0.10.0
libtpu: 0.0.40
codegen_flags: <defaults>
</compile_context>

<pallas_src>
import functools

import jax
import jax.numpy as jnp
from jax.experimental import pallas as pl
from jax.experimental.pallas import tpu as pltpu


# ---------------------------------------------------------------------------
# Fused kernel: attention block + FFN block for `bb` batch elements per step
# ---------------------------------------------------------------------------

def _fused_lookback_kernel(x_ref, wav_ref, bias_ref,
                           wq_ref, wkv_ref, wo_ref,
                           bq_ref, bkv_ref, bo_ref,
                           g1_ref, beta1_ref,
                           w1_ref, b1_ref, w2_ref, b2_ref,
                           g2_ref, beta2_ref,
                           o_ref, *, num_heads):
    bb, tq, C = x_ref.shape
    tk = wav_ref.shape[1]
    Dh = C // num_heads

    # ---- projections on flattened (bb*T, C) slabs (MXU M-dim filled) ----
    x = x_ref[...].reshape(bb * tq, C)                 # f32 residual source
    xb = x.astype(jnp.bfloat16)
    wb = wav_ref[...].reshape(bb * tk, C)              # already bf16

    # Q projection (attention scale already folded into wq / bq).
    q = jnp.dot(xb, wq_ref[...],
                preferred_element_type=jnp.float32) + bq_ref[...]
    # Fused K|V projection: one (bb*Tk, C) @ (C, 2C) matmul.
    kv = jnp.dot(wb, wkv_ref[...],
                 preferred_element_type=jnp.float32) + bkv_ref[...]

    qb = q.astype(jnp.bfloat16)
    kb = kv[:, :C].astype(jnp.bfloat16)
    vb = kv[:, C:].astype(jnp.bfloat16)

    bias_all = bias_ref[...]                           # (bb, 1, tk) f32

    # ---- attention core (per batch element, per head; static unroll) ----
    rows = []
    for b in range(bb):
        q_b = qb[b * tq:(b + 1) * tq, :]               # (tq, C)
        k_b = kb[b * tk:(b + 1) * tk, :]               # (tk, C)
        v_b = vb[b * tk:(b + 1) * tk, :]               # (tk, C)
        # hoisted: one (1,tk)->(tq,tk) broadcast per batch element
        bias_b = jnp.broadcast_to(bias_all[b], (tq, tk))

        head_out = []
        for h in range(num_heads):
            lo, hi = h * Dh, (h + 1) * Dh
            # scores = q_h @ k_h.T (contract last dims, no materialized .T)
            s = jax.lax.dot_general(q_b[:, lo:hi], k_b[:, lo:hi],
                                    (((1,), (1,)), ((), ())),
                                    preferred_element_type=jnp.float32)
            s = s + bias_b
            s = s - jnp.max(s, axis=-1, keepdims=True)
            p = jnp.exp(s)
            p = p / jnp.sum(p, axis=-1, keepdims=True)      # exact softmax
            head_out.append(jnp.dot(p.astype(jnp.bfloat16), v_b[:, lo:hi],
                                    preferred_element_type=jnp.float32))
        rows.append(jnp.concatenate(head_out, axis=-1))     # (tq, C)

    attn = jnp.concatenate(rows, axis=0).astype(jnp.bfloat16)  # (bb*tq, C)

    # ---- single out_proj matmul (K = C), bias + residual + LayerNorm ----
    y = jnp.dot(attn, wo_ref[...],
                preferred_element_type=jnp.float32) + bo_ref[...] + x
    mu = jnp.mean(y, axis=-1, keepdims=True)
    yc = y - mu
    var = jnp.mean(yc * yc, axis=-1, keepdims=True)
    h1 = yc * jax.lax.rsqrt(var + 1e-5) * g1_ref[...] + beta1_ref[...]

    # ---- fused FFN: fc1 -> SiLU -> fc2 -> +res -> LayerNorm --------------
    y1 = jnp.dot(h1.astype(jnp.bfloat16), w1_ref[...],
                 preferred_element_type=jnp.float32) + b1_ref[...]
    y1 = y1 * jax.nn.sigmoid(y1)                            # SiLU in VMEM
    y2 = jnp.dot(y1.astype(jnp.bfloat16), w2_ref[...],
                 preferred_element_type=jnp.float32) + b2_ref[...]
    z = y2 + h1
    mu2 = jnp.mean(z, axis=-1, keepdims=True)
    zc = z - mu2
    var2 = jnp.mean(zc * zc, axis=-1, keepdims=True)
    out = zc * jax.lax.rsqrt(var2 + 1e-5) * g2_ref[...] + beta2_ref[...]

    o_ref[...] = out.reshape(bb, tq, C)


# ---------------------------------------------------------------------------
# Wrapper
# ---------------------------------------------------------------------------

def _pick_group(B, Tq):
    """Largest divisor of B with roughly bb*Tq >= 256 rows per grid step."""
    target = max(1, 256 // max(Tq, 1))
    bb = max(1, min(B, target))
    while B % bb:
        bb -= 1
    return bb


def look_back_module(params, x, wav_feature, bf_shrink_padding_mask):
    Tq, B, C = x.shape
    Tk = wav_feature.shape[0]
    H = params["num_heads"]
    Dh = C // H
    scale = Dh ** -0.5
    F = params["w1"].shape[1]

    # (T,B,C) -> (B,T,C) once at the boundary.  x stays f32 (residual / LN
    # precision); wav is cast to bf16 *before* the transpose (it is only ever
    # a bf16 matmul operand) -> half the transpose + DMA traffic.
    xb = jnp.transpose(x, (1, 0, 2)).astype(jnp.float32)              # (B,Tq,C)
    wavb = jnp.transpose(wav_feature.astype(jnp.bfloat16), (1, 0, 2))  # (B,Tk,C)

    # key_padding_mask: True = padded -> large negative additive bias
    bias = jnp.where(bf_shrink_padding_mask, -1e30, 0.0).astype(jnp.float32)
    bias = bias.reshape(B, 1, Tk)

    bb = _pick_group(B, Tq)

    # Parameter prep: fold attention scale into Wq/bq, fuse Wk|Wv, bf16 weights.
    bf = lambda a: a.astype(jnp.bfloat16)
    row = lambda a, n: a.reshape(1, n).astype(jnp.float32)
    wq = bf(params["wq"] * scale)
    bq = row(params["bq"] * scale, C)
    wkv = bf(jnp.concatenate([params["wk"], params["wv"]], axis=1))   # (C, 2C)
    bkv = row(jnp.concatenate([params["bk"], params["bv"]]), 2 * C)
    wo = bf(params["wo"])
    bo = row(params["bo"], C)
    g1, be1 = row(params["ln1_g"], C), row(params["ln1_b"], C)
    w1, b1 = bf(params["w1"]), row(params["b1"], F)
    w2, b2 = bf(params["w2"]), row(params["b2"], C)
    g2, be2 = row(params["ln2_g"], C), row(params["ln2_b"], C)

    # Advisory cost estimate for XLA scheduling around the custom call.
    M, Mk = B * Tq, B * Tk
    flops = (2 * M * C * C + 2 * Mk * C * 2 * C + 4 * B * H * Tq * Tk * Dh
             + 2 * M * C * C + 4 * M * C * F)
    trans = B * H * Tq * Tk + M * F
    bytes_accessed = (4 * M * C + 2 * Mk * C + 4 * B * Tk + 4 * M * C
                      + 2 * (4 * C * C + 2 * C * F) + 4 * (9 * C + F))
    cost = pl.CostEstimate(flops=int(flops), transcendentals=int(trans),
                           bytes_accessed=int(bytes_accessed))

    const2d = lambda g: (0, 0)
    kern = functools.partial(_fused_lookback_kernel, num_heads=H)

    out = pl.pallas_call(
        kern,
        out_shape=jax.ShapeDtypeStruct((B, Tq, C), jnp.float32),
        grid=(B // bb,),
        in_specs=[
            pl.BlockSpec((bb, Tq, C), lambda g: (g, 0, 0)),   # x (f32)
            pl.BlockSpec((bb, Tk, C), lambda g: (g, 0, 0)),   # wav (bf16)
            pl.BlockSpec((bb, 1, Tk), lambda g: (g, 0, 0)),   # key-pad bias
            pl.BlockSpec((C, C), const2d),                    # wq (scaled)
            pl.BlockSpec((C, 2 * C), const2d),                # wk|wv
            pl.BlockSpec((C, C), const2d),                    # wo
            pl.BlockSpec((1, C), const2d),                    # bq (scaled)
            pl.BlockSpec((1, 2 * C), const2d),                # bk|bv
            pl.BlockSpec((1, C), const2d),                    # bo
            pl.BlockSpec((1, C), const2d),                    # ln1 gamma
            pl.BlockSpec((1, C), const2d),                    # ln1 beta
            pl.BlockSpec((C, F), const2d),                    # w1
            pl.BlockSpec((1, F), const2d),                    # b1
            pl.BlockSpec((F, C), const2d),                    # w2
            pl.BlockSpec((1, C), const2d),                    # b2
            pl.BlockSpec((1, C), const2d),                    # ln2 gamma
            pl.BlockSpec((1, C), const2d),                    # ln2 beta
        ],
        out_specs=pl.BlockSpec((bb, Tq, C), lambda g: (g, 0, 0)),
        compiler_params=pltpu.CompilerParams(
            dimension_semantics=("parallel",),
            vmem_limit_bytes=64 * 1024 * 1024),
        cost_estimate=cost,
    )(xb, wavb, bias,
      wq, wkv, wo, bq, bkv, bo, g1, be1, w1, b1, w2, b2, g2, be2)

    return jnp.transpose(out, (1, 0, 2))                      # (Tq, B, C)


# ---------------------------------------------------------------------------
# Deterministic parameter init + example run
# ---------------------------------------------------------------------------

def init_params(key, embed_dim, ffn_dim, num_heads):
    keys = jax.random.split(key, 8)
    s = 0.02

    def w(k, shape):
        return (s * jax.random.normal(k, shape)).astype(jnp.float32)

    return {
        "num_heads": num_heads,
        "wq": w(keys[0], (embed_dim, embed_dim)),
        "bq": jnp.zeros((embed_dim,), jnp.float32),
        "wk": w(keys[1], (embed_dim, embed_dim)),
        "bk": jnp.zeros((embed_dim,), jnp.float32),
        "wv": w(keys[2], (embed_dim, embed_dim)),
        "bv": jnp.zeros((embed_dim,), jnp.float32),
        "wo": w(keys[3], (embed_dim, embed_dim)),
        "bo": jnp.zeros((embed_dim,), jnp.float32),
        "ln1_g": jnp.ones((embed_dim,), jnp.float32),
        "ln1_b": jnp.zeros((embed_dim,), jnp.float32),
        "w1": w(keys[4], (embed_dim, ffn_dim)),
        "b1": jnp.zeros((ffn_dim,), jnp.float32),
        "w2": w(keys[5], (ffn_dim, embed_dim)),
        "b2": jnp.zeros((embed_dim,), jnp.float32),
        "ln2_g": jnp.ones((embed_dim,), jnp.float32),
        "ln2_b": jnp.zeros((embed_dim,), jnp.float32),
    }


if __name__ == "__main__":
    EMBED, FFN, HEADS = 32, 64, 4
    TQ, TK, B = 8, 16, 2

    key = jax.random.PRNGKey(0)
    kp, kx, kw = jax.random.split(key, 3)

    params = init_params(kp, EMBED, FFN, HEADS)
    x = jax.random.normal(kx, (TQ, B, EMBED), jnp.float32)
    wav_feature = jax.random.normal(kw, (TK, B, EMBED), jnp.float32)

    # batch 0: no padding; batch 1: last 4 key positions padded
    pos = jnp.arange(TK)[None, :]
    lengths = jnp.array([TK, TK - 4])[:, None]
    bf_shrink_padding_mask = pos >= lengths            # (B, Tk) bool, True = pad

    out = look_back_module(params, x, wav_feature, bf_shrink_padding_mask)
    out = jax.block_until_ready(out)
    assert out.shape == (TQ, B, EMBED)
    assert bool(jnp.all(jnp.isfinite(out)))
    print("KERNEL_OK")
</pallas_src>

<mosaic_0001>
module attributes {stable_mosaic.version = 11 : i64} {
  func.func @_fused_lookback_kernel(%arg0: i32, %arg1: memref<2x8x32xf32, #tpu.memory_space<vmem>>, %arg2: memref<2x16x32xbf16, #tpu.memory_space<vmem>>, %arg3: memref<2x1x16xf32, #tpu.memory_space<vmem>>, %arg4: memref<32x32xbf16, #tpu.memory_space<vmem>>, %arg5: memref<32x64xbf16, #tpu.memory_space<vmem>>, %arg6: memref<32x32xbf16, #tpu.memory_space<vmem>>, %arg7: memref<1x32xf32, #tpu.memory_space<vmem>>, %arg8: memref<1x64xf32, #tpu.memory_space<vmem>>, %arg9: memref<1x32xf32, #tpu.memory_space<vmem>>, %arg10: memref<1x32xf32, #tpu.memory_space<vmem>>, %arg11: memref<1x32xf32, #tpu.memory_space<vmem>>, %arg12: memref<32x64xbf16, #tpu.memory_space<vmem>>, %arg13: memref<1x64xf32, #tpu.memory_space<vmem>>, %arg14: memref<64x32xbf16, #tpu.memory_space<vmem>>, %arg15: memref<1x32xf32, #tpu.memory_space<vmem>>, %arg16: memref<1x32xf32, #tpu.memory_space<vmem>>, %arg17: memref<1x32xf32, #tpu.memory_space<vmem>>, %arg18: memref<2x8x32xf32, #tpu.memory_space<vmem>>) attributes {dimension_semantics = [#tpu.dimension_semantics<parallel>], iteration_bounds = array<i64: 1>, scalar_prefetch = 0 : i64, scratch_operands = 0 : i64, tpu.core_type = #tpu.core_type<tc>, window_params = [{transform_indices = @transform_0, window_bounds = array<i64: 2, 8, 32>}, {transform_indices = @transform_1, window_bounds = array<i64: 2, 16, 32>}, {transform_indices = @transform_2, window_bounds = array<i64: 2, 1, 16>}, {pipeline_mode = #tpu.pipeline_mode<synchronous>, transform_indices = @transform_3, window_bounds = array<i64: 32, 32>}, {pipeline_mode = #tpu.pipeline_mode<synchronous>, transform_indices = @transform_4, window_bounds = array<i64: 32, 64>}, {pipeline_mode = #tpu.pipeline_mode<synchronous>, transform_indices = @transform_5, window_bounds = array<i64: 32, 32>}, {pipeline_mode = #tpu.pipeline_mode<synchronous>, transform_indices = @transform_6, window_bounds = array<i64: 1, 32>}, {pipeline_mode = #tpu.pipeline_mode<synchronous>, transform_indices = @transform_7, window_bounds = array<i64: 1, 64>}, {pipeline_mode = #tpu.pipeline_mode<synchronous>, transform_indices = @transform_8, window_bounds = array<i64: 1, 32>}, {pipeline_mode = #tpu.pipeline_mode<synchronous>, transform_indices = @transform_9, window_bounds = array<i64: 1, 32>}, {pipeline_mode = #tpu.pipeline_mode<synchronous>, transform_indices = @transform_10, window_bounds = array<i64: 1, 32>}, {pipeline_mode = #tpu.pipeline_mode<synchronous>, transform_indices = @transform_11, window_bounds = array<i64: 32, 64>}, {pipeline_mode = #tpu.pipeline_mode<synchronous>, transform_indices = @transform_12, window_bounds = array<i64: 1, 64>}, {pipeline_mode = #tpu.pipeline_mode<synchronous>, transform_indices = @transform_13, window_bounds = array<i64: 64, 32>}, {pipeline_mode = #tpu.pipeline_mode<synchronous>, transform_indices = @transform_14, window_bounds = array<i64: 1, 32>}, {pipeline_mode = #tpu.pipeline_mode<synchronous>, transform_indices = @transform_15, window_bounds = array<i64: 1, 32>}, {pipeline_mode = #tpu.pipeline_mode<synchronous>, transform_indices = @transform_16, window_bounds = array<i64: 1, 32>}, {transform_indices = @transform_17, window_bounds = array<i64: 2, 8, 32>}]} {
    %c0 = arith.constant 0 : index
    %c0_0 = arith.constant 0 : index
    %c0_1 = arith.constant 0 : index
    %0 = vector.load %arg1[%c0, %c0_0, %c0_1] : memref<2x8x32xf32, #tpu.memory_space<vmem>>, vector<2x8x32xf32>
    %1 = vector.shape_cast %0 : vector<2x8x32xf32> to vector<16x32xf32>
    %2 = arith.truncf %1 : vector<16x32xf32> to vector<16x32xbf16>
    %c0_2 = arith.constant 0 : index
    %c0_3 = arith.constant 0 : index
    %c0_4 = arith.constant 0 : index
    %3 = vector.load %arg2[%c0_2, %c0_3, %c0_4] : memref<2x16x32xbf16, #tpu.memory_space<vmem>>, vector<2x16x32xbf16>
    %4 = vector.shape_cast %3 : vector<2x16x32xbf16> to vector<32x32xbf16>
    %c0_5 = arith.constant 0 : index
    %c0_6 = arith.constant 0 : index
    %5 = vector.load %arg4[%c0_5, %c0_6] : memref<32x32xbf16, #tpu.memory_space<vmem>>, vector<32x32xbf16>
    %cst = arith.constant dense<0.000000e+00> : vector<16x32xf32>
    %6 = tpu.matmul %2, %5, %cst {dimension_numbers = #tpu.dot_dimension_numbers<[1], [0], [0], [1], [0, 0, 1, 1], [], []>} : vector<16x32xbf16>, vector<32x32xbf16>, vector<16x32xf32> -> vector<16x32xf32>
    %c0_7 = arith.constant 0 : index
    %c0_8 = arith.constant 0 : index
    %7 = vector.load %arg7[%c0_7, %c0_8] : memref<1x32xf32, #tpu.memory_space<vmem>>, vector<1x32xf32>
    %8 = vector.broadcast %7 : vector<1x32xf32> to vector<16x32xf32>
    %9 = arith.addf %6, %8 : vector<16x32xf32>
    %c0_9 = arith.constant 0 : index
    %c0_10 = arith.constant 0 : index
    %10 = vector.load %arg5[%c0_9, %c0_10] : memref<32x64xbf16, #tpu.memory_space<vmem>>, vector<32x64xbf16>
    %cst_11 = arith.constant dense<0.000000e+00> : vector<32x64xf32>
    %11 = tpu.matmul %4, %10, %cst_11 {dimension_numbers = #tpu.dot_dimension_numbers<[1], [0], [0], [1], [0, 0, 1, 1], [], []>} : vector<32x32xbf16>, vector<32x64xbf16>, vector<32x64xf32> -> vector<32x64xf32>
    %c0_12 = arith.constant 0 : index
    %c0_13 = arith.constant 0 : index
    %12 = vector.load %arg8[%c0_12, %c0_13] : memref<1x64xf32, #tpu.memory_space<vmem>>, vector<1x64xf32>
    %13 = vector.broadcast %12 : vector<1x64xf32> to vector<32x64xf32>
    %14 = arith.addf %11, %13 : vector<32x64xf32>
    %15 = arith.truncf %9 : vector<16x32xf32> to vector<16x32xbf16>
    %16 = vector.extract_strided_slice %14 {offsets = [0, 0], sizes = [32, 32], strides = [1, 1]} : vector<32x64xf32> to vector<32x32xf32>
    %17 = arith.truncf %16 : vector<32x32xf32> to vector<32x32xbf16>
    %18 = vector.extract_strided_slice %14 {offsets = [0, 32], sizes = [32, 32], strides = [1, 1]} : vector<32x64xf32> to vector<32x32xf32>
    %19 = arith.truncf %18 : vector<32x32xf32> to vector<32x32xbf16>
    %c0_14 = arith.constant 0 : index
    %c0_15 = arith.constant 0 : index
    %c0_16 = arith.constant 0 : index
    %20 = vector.load %arg3[%c0_14, %c0_15, %c0_16] : memref<2x1x16xf32, #tpu.memory_space<vmem>>, vector<2x1x16xf32>
    %21 = vector.extract_strided_slice %15 {offsets = [0, 0], sizes = [8, 32], strides = [1, 1]} : vector<16x32xbf16> to vector<8x32xbf16>
    %22 = vector.extract_strided_slice %17 {offsets = [0, 0], sizes = [16, 32], strides = [1, 1]} : vector<32x32xbf16> to vector<16x32xbf16>
    %23 = vector.extract_strided_slice %19 {offsets = [0, 0], sizes = [16, 32], strides = [1, 1]} : vector<32x32xbf16> to vector<16x32xbf16>
    %24 = vector.extract_strided_slice %20 {offsets = [0, 0, 0], sizes = [1, 1, 16], strides = [1, 1, 1]} : vector<2x1x16xf32> to vector<1x1x16xf32>
    %25 = vector.shape_cast %24 : vector<1x1x16xf32> to vector<1x16xf32>
    %26 = vector.shape_cast %25 : vector<1x16xf32> to vector<1x16xf32>
    %27 = vector.broadcast %26 : vector<1x16xf32> to vector<8x16xf32>
    %28 = vector.extract_strided_slice %21 {offsets = [0, 0], sizes = [8, 8], strides = [1, 1]} : vector<8x32xbf16> to vector<8x8xbf16>
    %29 = vector.extract_strided_slice %22 {offsets = [0, 0], sizes = [16, 8], strides = [1, 1]} : vector<16x32xbf16> to vector<16x8xbf16>
    %cst_17 = arith.constant dense<0.000000e+00> : vector<8x16xf32>
    %30 = tpu.matmul %28, %29, %cst_17 {dimension_numbers = #tpu.dot_dimension_numbers<[1], [1], [0], [0], [0, 0, 1, 0], [], []>} : vector<8x8xbf16>, vector<16x8xbf16>, vector<8x16xf32> -> vector<8x16xf32>
    %31 = arith.addf %30, %27 : vector<8x16xf32>
    %cst_18 = arith.constant dense<0xFF800000> : vector<8xf32>
    %32 = vector.multi_reduction <maximumf>, %31, %cst_18 [1] : vector<8x16xf32> to vector<8xf32>
    %33 = vector.shape_cast %32 : vector<8xf32> to vector<8x1xf32>
    %34 = vector.broadcast %33 : vector<8x1xf32> to vector<8x16xf32>
    %35 = arith.subf %31, %34 : vector<8x16xf32>
    %36 = math.exp %35 : vector<8x16xf32>
    %cst_19 = arith.constant dense<0.000000e+00> : vector<8xf32>
    %37 = vector.multi_reduction <add>, %36, %cst_19 [1] : vector<8x16xf32> to vector<8xf32>
    %38 = vector.shape_cast %37 : vector<8xf32> to vector<8x1xf32>
    %39 = vector.broadcast %38 : vector<8x1xf32> to vector<8x16xf32>
    %40 = arith.divf %36, %39 : vector<8x16xf32>
    %41 = arith.truncf %40 : vector<8x16xf32> to vector<8x16xbf16>
    %42 = vector.extract_strided_slice %23 {offsets = [0, 0], sizes = [16, 8], strides = [1, 1]} : vector<16x32xbf16> to vector<16x8xbf16>
    %cst_20 = arith.constant dense<0.000000e+00> : vector<8x8xf32>
    %43 = tpu.matmul %41, %42, %cst_20 {dimension_numbers = #tpu.dot_dimension_numbers<[1], [0], [0], [1], [0, 0, 1, 1], [], []>} : vector<8x16xbf16>, vector<16x8xbf16>, vector<8x8xf32> -> vector<8x8xf32>
    %44 = vector.extract_strided_slice %21 {offsets = [0, 8], sizes = [8, 8], strides = [1, 1]} : vector<8x32xbf16> to vector<8x8xbf16>
    %45 = vector.extract_strided_slice %22 {offsets = [0, 8], sizes = [16, 8], strides = [1, 1]} : vector<16x32xbf16> to vector<16x8xbf16>
    %cst_21 = arith.constant dense<0.000000e+00> : vector<8x16xf32>
    %46 = tpu.matmul %44, %45, %cst_21 {dimension_numbers = #tpu.dot_dimension_numbers<[1], [1], [0], [0], [0, 0, 1, 0], [], []>} : vector<8x8xbf16>, vector<16x8xbf16>, vector<8x16xf32> -> vector<8x16xf32>
    %47 = arith.addf %46, %27 : vector<8x16xf32>
    %cst_22 = arith.constant dense<0xFF800000> : vector<8xf32>
    %48 = vector.multi_reduction <maximumf>, %47, %cst_22 [1] : vector<8x16xf32> to vector<8xf32>
    %49 = vector.shape_cast %48 : vector<8xf32> to vector<8x1xf32>
    %50 = vector.broadcast %49 : vector<8x1xf32> to vector<8x16xf32>
    %51 = arith.subf %47, %50 : vector<8x16xf32>
    %52 = math.exp %51 : vector<8x16xf32>
    %cst_23 = arith.constant dense<0.000000e+00> : vector<8xf32>
    %53 = vector.multi_reduction <add>, %52, %cst_23 [1] : vector<8x16xf32> to vector<8xf32>
    %54 = vector.shape_cast %53 : vector<8xf32> to vector<8x1xf32>
    %55 = vector.broadcast %54 : vector<8x1xf32> to vector<8x16xf32>
    %56 = arith.divf %52, %55 : vector<8x16xf32>
    %57 = arith.truncf %56 : vector<8x16xf32> to vector<8x16xbf16>
    %58 = vector.extract_strided_slice %23 {offsets = [0, 8], sizes = [16, 8], strides = [1, 1]} : vector<16x32xbf16> to vector<16x8xbf16>
    %cst_24 = arith.constant dense<0.000000e+00> : vector<8x8xf32>
    %59 = tpu.matmul %57, %58, %cst_24 {dimension_numbers = #tpu.dot_dimension_numbers<[1], [0], [0], [1], [0, 0, 1, 1], [], []>} : vector<8x16xbf16>, vector<16x8xbf16>, vector<8x8xf32> -> vector<8x8xf32>
    %60 = vector.extract_strided_slice %21 {offsets = [0, 16], sizes = [8, 8], strides = [1, 1]} : vector<8x32xbf16> to vector<8x8xbf16>
    %61 = vector.extract_strided_slice %22 {offsets = [0, 16], sizes = [16, 8], strides = [1, 1]} : vector<16x32xbf16> to vector<16x8xbf16>
    %cst_25 = arith.constant dense<0.000000e+00> : vector<8x16xf32>
    %62 = tpu.matmul %60, %61, %cst_25 {dimension_numbers = #tpu.dot_dimension_numbers<[1], [1], [0], [0], [0, 0, 1, 0], [], []>} : vector<8x8xbf16>, vector<16x8xbf16>, vector<8x16xf32> -> vector<8x16xf32>
    %63 = arith.addf %62, %27 : vector<8x16xf32>
    %cst_26 = arith.constant dense<0xFF800000> : vector<8xf32>
    %64 = vector.multi_reduction <maximumf>, %63, %cst_26 [1] : vector<8x16xf32> to vector<8xf32>
    %65 = vector.shape_cast %64 : vector<8xf32> to vector<8x1xf32>
    %66 = vector.broadcast %65 : vector<8x1xf32> to vector<8x16xf32>
    %67 = arith.subf %63, %66 : vector<8x16xf32>
    %68 = math.exp %67 : vector<8x16xf32>
    %cst_27 = arith.constant dense<0.000000e+00> : vector<8xf32>
    %69 = vector.multi_reduction <add>, %68, %cst_27 [1] : vector<8x16xf32> to vector<8xf32>
    %70 = vector.shape_cast %69 : vector<8xf32> to vector<8x1xf32>
    %71 = vector.broadcast %70 : vector<8x1xf32> to vector<8x16xf32>
    %72 = arith.divf %68, %71 : vector<8x16xf32>
    %73 = arith.truncf %72 : vector<8x16xf32> to vector<8x16xbf16>
    %74 = vector.extract_strided_slice %23 {offsets = [0, 16], sizes = [16, 8], strides = [1, 1]} : vector<16x32xbf16> to vector<16x8xbf16>
    %cst_28 = arith.constant dense<0.000000e+00> : vector<8x8xf32>
    %75 = tpu.matmul %73, %74, %cst_28 {dimension_numbers = #tpu.dot_dimension_numbers<[1], [0], [0], [1], [0, 0, 1, 1], [], []>} : vector<8x16xbf16>, vector<16x8xbf16>, vector<8x8xf32> -> vector<8x8xf32>
    %76 = vector.extract_strided_slice %21 {offsets = [0, 24], sizes = [8, 8], strides = [1, 1]} : vector<8x32xbf16> to vector<8x8xbf16>
    %77 = vector.extract_strided_slice %22 {offsets = [0, 24], sizes = [16, 8], strides = [1, 1]} : vector<16x32xbf16> to vector<16x8xbf16>
    %cst_29 = arith.constant dense<0.000000e+00> : vector<8x16xf32>
    %78 = tpu.matmul %76, %77, %cst_29 {dimension_numbers = #tpu.dot_dimension_numbers<[1], [1], [0], [0], [0, 0, 1, 0], [], []>} : vector<8x8xbf16>, vector<16x8xbf16>, vector<8x16xf32> -> vector<8x16xf32>
    %79 = arith.addf %78, %27 : vector<8x16xf32>
    %cst_30 = arith.constant dense<0xFF800000> : vector<8xf32>
    %80 = vector.multi_reduction <maximumf>, %79, %cst_30 [1] : vector<8x16xf32> to vector<8xf32>
    %81 = vector.shape_cast %80 : vector<8xf32> to vector<8x1xf32>
    %82 = vector.broadcast %81 : vector<8x1xf32> to vector<8x16xf32>
    %83 = arith.subf %79, %82 : vector<8x16xf32>
    %84 = math.exp %83 : vector<8x16xf32>
    %cst_31 = arith.constant dense<0.000000e+00> : vector<8xf32>
    %85 = vector.multi_reduction <add>, %84, %cst_31 [1] : vector<8x16xf32> to vector<8xf32>
    %86 = vector.shape_cast %85 : vector<8xf32> to vector<8x1xf32>
    %87 = vector.broadcast %86 : vector<8x1xf32> to vector<8x16xf32>
    %88 = arith.divf %84, %87 : vector<8x16xf32>
    %89 = arith.truncf %88 : vector<8x16xf32> to vector<8x16xbf16>
    %90 = vector.extract_strided_slice %23 {offsets = [0, 24], sizes = [16, 8], strides = [1, 1]} : vector<16x32xbf16> to vector<16x8xbf16>
    %cst_32 = arith.constant dense<0.000000e+00> : vector<8x8xf32>
    %91 = tpu.matmul %89, %90, %cst_32 {dimension_numbers = #tpu.dot_dimension_numbers<[1], [0], [0], [1], [0, 0, 1, 1], [], []>} : vector<8x16xbf16>, vector<16x8xbf16>, vector<8x8xf32> -> vector<8x8xf32>
    %92 = tpu.concatenate %43, %59, %75, %91 in 1 : vector<8x8xf32>, vector<8x8xf32>, vector<8x8xf32>, vector<8x8xf32> -> vector<8x32xf32>
    %93 = vector.extract_strided_slice %15 {offsets = [8, 0], sizes = [8, 32], strides = [1, 1]} : vector<16x32xbf16> to vector<8x32xbf16>
    %94 = vector.extract_strided_slice %17 {offsets = [16, 0], sizes = [16, 32], strides = [1, 1]} : vector<32x32xbf16> to vector<16x32xbf16>
    %95 = vector.extract_strided_slice %19 {offsets = [16, 0], sizes = [16, 32], strides = [1, 1]} : vector<32x32xbf16> to vector<16x32xbf16>
    %96 = vector.extract_strided_slice %20 {offsets = [1, 0, 0], sizes = [1, 1, 16], strides = [1, 1, 1]} : vector<2x1x16xf32> to vector<1x1x16xf32>
    %97 = vector.shape_cast %96 : vector<1x1x16xf32> to vector<1x16xf32>
    %98 = vector.shape_cast %97 : vector<1x16xf32> to vector<1x16xf32>
    %99 = vector.broadcast %98 : vector<1x16xf32> to vector<8x16xf32>
    %100 = vector.extract_strided_slice %93 {offsets = [0, 0], sizes = [8, 8], strides = [1, 1]} : vector<8x32xbf16> to vector<8x8xbf16>
    %101 = vector.extract_strided_slice %94 {offsets = [0, 0], sizes = [16, 8], strides = [1, 1]} : vector<16x32xbf16> to vector<16x8xbf16>
    %cst_33 = arith.constant dense<0.000000e+00> : vector<8x16xf32>
    %102 = tpu.matmul %100, %101, %cst_33 {dimension_numbers = #tpu.dot_dimension_numbers<[1], [1], [0], [0], [0, 0, 1, 0], [], []>} : vector<8x8xbf16>, vector<16x8xbf16>, vector<8x16xf32> -> vector<8x16xf32>
    %103 = arith.addf %102, %99 : vector<8x16xf32>
    %cst_34 = arith.constant dense<0xFF800000> : vector<8xf32>
    %104 = vector.multi_reduction <maximumf>, %103, %cst_34 [1] : vector<8x16xf32> to vector<8xf32>
    %105 = vector.shape_cast %104 : vector<8xf32> to vector<8x1xf32>
    %106 = vector.broadcast %105 : vector<8x1xf32> to vector<8x16xf32>
    %107 = arith.subf %103, %106 : vector<8x16xf32>
    %108 = math.exp %107 : vector<8x16xf32>
    %cst_35 = arith.constant dense<0.000000e+00> : vector<8xf32>
    %109 = vector.multi_reduction <add>, %108, %cst_35 [1] : vector<8x16xf32> to vector<8xf32>
    %110 = vector.shape_cast %109 : vector<8xf32> to vector<8x1xf32>
    %111 = vector.broadcast %110 : vector<8x1xf32> to vector<8x16xf32>
    %112 = arith.divf %108, %111 : vector<8x16xf32>
    %113 = arith.truncf %112 : vector<8x16xf32> to vector<8x16xbf16>
    %114 = vector.extract_strided_slice %95 {offsets = [0, 0], sizes = [16, 8], strides = [1, 1]} : vector<16x32xbf16> to vector<16x8xbf16>
    %cst_36 = arith.constant dense<0.000000e+00> : vector<8x8xf32>
    %115 = tpu.matmul %113, %114, %cst_36 {dimension_numbers = #tpu.dot_dimension_numbers<[1], [0], [0], [1], [0, 0, 1, 1], [], []>} : vector<8x16xbf16>, vector<16x8xbf16>, vector<8x8xf32> -> vector<8x8xf32>
    %116 = vector.extract_strided_slice %93 {offsets = [0, 8], sizes = [8, 8], strides = [1, 1]} : vector<8x32xbf16> to vector<8x8xbf16>
    %117 = vector.extract_strided_slice %94 {offsets = [0, 8], sizes = [16, 8], strides = [1, 1]} : vector<16x32xbf16> to vector<16x8xbf16>
    %cst_37 = arith.constant dense<0.000000e+00> : vector<8x16xf32>
    %118 = tpu.matmul %116, %117, %cst_37 {dimension_numbers = #tpu.dot_dimension_numbers<[1], [1], [0], [0], [0, 0, 1, 0], [], []>} : vector<8x8xbf16>, vector<16x8xbf16>, vector<8x16xf32> -> vector<8x16xf32>
    %119 = arith.addf %118, %99 : vector<8x16xf32>
    %cst_38 = arith.constant dense<0xFF800000> : vector<8xf32>
    %120 = vector.multi_reduction <maximumf>, %119, %cst_38 [1] : vector<8x16xf32> to vector<8xf32>
    %121 = vector.shape_cast %120 : vector<8xf32> to vector<8x1xf32>
    %122 = vector.broadcast %121 : vector<8x1xf32> to vector<8x16xf32>
    %123 = arith.subf %119, %122 : vector<8x16xf32>
    %124 = math.exp %123 : vector<8x16xf32>
    %cst_39 = arith.constant dense<0.000000e+00> : vector<8xf32>
    %125 = vector.multi_reduction <add>, %124, %cst_39 [1] : vector<8x16xf32> to vector<8xf32>
    %126 = vector.shape_cast %125 : vector<8xf32> to vector<8x1xf32>
    %127 = vector.broadcast %126 : vector<8x1xf32> to vector<8x16xf32>
    %128 = arith.divf %124, %127 : vector<8x16xf32>
    %129 = arith.truncf %128 : vector<8x16xf32> to vector<8x16xbf16>
    %130 = vector.extract_strided_slice %95 {offsets = [0, 8], sizes = [16, 8], strides = [1, 1]} : vector<16x32xbf16> to vector<16x8xbf16>
    %cst_40 = arith.constant dense<0.000000e+00> : vector<8x8xf32>
    %131 = tpu.matmul %129, %130, %cst_40 {dimension_numbers = #tpu.dot_dimension_numbers<[1], [0], [0], [1], [0, 0, 1, 1], [], []>} : vector<8x16xbf16>, vector<16x8xbf16>, vector<8x8xf32> -> vector<8x8xf32>
    %132 = vector.extract_strided_slice %93 {offsets = [0, 16], sizes = [8, 8], strides = [1, 1]} : vector<8x32xbf16> to vector<8x8xbf16>
    %133 = vector.extract_strided_slice %94 {offsets = [0, 16], sizes = [16, 8], strides = [1, 1]} : vector<16x32xbf16> to vector<16x8xbf16>
    %cst_41 = arith.constant dense<0.000000e+00> : vector<8x16xf32>
    %134 = tpu.matmul %132, %133, %cst_41 {dimension_numbers = #tpu.dot_dimension_numbers<[1], [1], [0], [0], [0, 0, 1, 0], [], []>} : vector<8x8xbf16>, vector<16x8xbf16>, vector<8x16xf32> -> vector<8x16xf32>
    %135 = arith.addf %134, %99 : vector<8x16xf32>
    %cst_42 = arith.constant dense<0xFF800000> : vector<8xf32>
    %136 = vector.multi_reduction <maximumf>, %135, %cst_42 [1] : vector<8x16xf32> to vector<8xf32>
    %137 = vector.shape_cast %136 : vector<8xf32> to vector<8x1xf32>
    %138 = vector.broadcast %137 : vector<8x1xf32> to vector<8x16xf32>
    %139 = arith.subf %135, %138 : vector<8x16xf32>
    %140 = math.exp %139 : vector<8x16xf32>
    %cst_43 = arith.constant dense<0.000000e+00> : vector<8xf32>
    %141 = vector.multi_reduction <add>, %140, %cst_43 [1] : vector<8x16xf32> to vector<8xf32>
    %142 = vector.shape_cast %141 : vector<8xf32> to vector<8x1xf32>
    %143 = vector.broadcast %142 : vector<8x1xf32> to vector<8x16xf32>
    %144 = arith.divf %140, %143 : vector<8x16xf32>
    %145 = arith.truncf %144 : vector<8x16xf32> to vector<8x16xbf16>
    %146 = vector.extract_strided_slice %95 {offsets = [0, 16], sizes = [16, 8], strides = [1, 1]} : vector<16x32xbf16> to vector<16x8xbf16>
    %cst_44 = arith.constant dense<0.000000e+00> : vector<8x8xf32>
    %147 = tpu.matmul %145, %146, %cst_44 {dimension_numbers = #tpu.dot_dimension_numbers<[1], [0], [0], [1], [0, 0, 1, 1], [], []>} : vector<8x16xbf16>, vector<16x8xbf16>, vector<8x8xf32> -> vector<8x8xf32>
    %148 = vector.extract_strided_slice %93 {offsets = [0, 24], sizes = [8, 8], strides = [1, 1]} : vector<8x32xbf16> to vector<8x8xbf16>
    %149 = vector.extract_strided_slice %94 {offsets = [0, 24], sizes = [16, 8], strides = [1, 1]} : vector<16x32xbf16> to vector<16x8xbf16>
    %cst_45 = arith.constant dense<0.000000e+00> : vector<8x16xf32>
    %150 = tpu.matmul %148, %149, %cst_45 {dimension_numbers = #tpu.dot_dimension_numbers<[1], [1], [0], [0], [0, 0, 1, 0], [], []>} : vector<8x8xbf16>, vector<16x8xbf16>, vector<8x16xf32> -> vector<8x16xf32>
    %151 = arith.addf %150, %99 : vector<8x16xf32>
    %cst_46 = arith.constant dense<0xFF800000> : vector<8xf32>
    %152 = vector.multi_reduction <maximumf>, %151, %cst_46 [1] : vector<8x16xf32> to vector<8xf32>
    %153 = vector.shape_cast %152 : vector<8xf32> to vector<8x1xf32>
    %154 = vector.broadcast %153 : vector<8x1xf32> to vector<8x16xf32>
    %155 = arith.subf %151, %154 : vector<8x16xf32>
    %156 = math.exp %155 : vector<8x16xf32>
    %cst_47 = arith.constant dense<0.000000e+00> : vector<8xf32>
    %157 = vector.multi_reduction <add>, %156, %cst_47 [1] : vector<8x16xf32> to vector<8xf32>
    %158 = vector.shape_cast %157 : vector<8xf32> to vector<8x1xf32>
    %159 = vector.broadcast %158 : vector<8x1xf32> to vector<8x16xf32>
    %160 = arith.divf %156, %159 : vector<8x16xf32>
    %161 = arith.truncf %160 : vector<8x16xf32> to vector<8x16xbf16>
    %162 = vector.extract_strided_slice %95 {offsets = [0, 24], sizes = [16, 8], strides = [1, 1]} : vector<16x32xbf16> to vector<16x8xbf16>
    %cst_48 = arith.constant dense<0.000000e+00> : vector<8x8xf32>
    %163 = tpu.matmul %161, %162, %cst_48 {dimension_numbers = #tpu.dot_dimension_numbers<[1], [0], [0], [1], [0, 0, 1, 1], [], []>} : vector<8x16xbf16>, vector<16x8xbf16>, vector<8x8xf32> -> vector<8x8xf32>
    %164 = tpu.concatenate %115, %131, %147, %163 in 1 : vector<8x8xf32>, vector<8x8xf32>, vector<8x8xf32>, vector<8x8xf32> -> vector<8x32xf32>
    %165 = tpu.concatenate %92, %164 in 0 : vector<8x32xf32>, vector<8x32xf32> -> vector<16x32xf32>
    %166 = arith.truncf %165 : vector<16x32xf32> to vector<16x32xbf16>
    %c0_49 = arith.constant 0 : index
    %c0_50 = arith.constant 0 : index
    %167 = vector.load %arg6[%c0_49, %c0_50] : memref<32x32xbf16, #tpu.memory_space<vmem>>, vector<32x32xbf16>
    %cst_51 = arith.constant dense<0.000000e+00> : vector<16x32xf32>
    %168 = tpu.matmul %166, %167, %cst_51 {dimension_numbers = #tpu.dot_dimension_numbers<[1], [0], [0], [1], [0, 0, 1, 1], [], []>} : vector<16x32xbf16>, vector<32x32xbf16>, vector<16x32xf32> -> vector<16x32xf32>
    %c0_52 = arith.constant 0 : index
    %c0_53 = arith.constant 0 : index
    %169 = vector.load %arg9[%c0_52, %c0_53] : memref<1x32xf32, #tpu.memory_space<vmem>>, vector<1x32xf32>
    %170 = vector.broadcast %169 : vector<1x32xf32> to vector<16x32xf32>
    %171 = arith.addf %168, %170 : vector<16x32xf32>
    %172 = arith.addf %171, %1 : vector<16x32xf32>
    %cst_54 = arith.constant dense<0.000000e+00> : vector<16xf32>
    %173 = vector.multi_reduction <add>, %172, %cst_54 [1] : vector<16x32xf32> to vector<16xf32>
    %174 = vector.shape_cast %173 : vector<16xf32> to vector<16x1xf32>
    %cst_55 = arith.constant 3.200000e+01 : f32
    %175 = vector.broadcast %cst_55 : f32 to vector<16x1xf32>
    %176 = arith.divf %174, %175 : vector<16x1xf32>
    %177 = vector.broadcast %176 : vector<16x1xf32> to vector<16x32xf32>
    %178 = arith.subf %172, %177 : vector<16x32xf32>
    %179 = arith.mulf %178, %178 : vector<16x32xf32>
    %cst_56 = arith.constant dense<0.000000e+00> : vector<16xf32>
    %180 = vector.multi_reduction <add>, %179, %cst_56 [1] : vector<16x32xf32> to vector<16xf32>
    %181 = vector.shape_cast %180 : vector<16xf32> to vector<16x1xf32>
    %cst_57 = arith.constant 3.200000e+01 : f32
    %182 = vector.broadcast %cst_57 : f32 to vector<16x1xf32>
    %183 = arith.divf %181, %182 : vector<16x1xf32>
    %cst_58 = arith.constant 9.99999974E-6 : f32
    %184 = vector.broadcast %cst_58 : f32 to vector<16x1xf32>
    %185 = arith.addf %183, %184 : vector<16x1xf32>
    %186 = math.rsqrt %185 : vector<16x1xf32>
    %187 = vector.broadcast %186 : vector<16x1xf32> to vector<16x32xf32>
    %188 = arith.mulf %178, %187 : vector<16x32xf32>
    %c0_59 = arith.constant 0 : index
    %c0_60 = arith.constant 0 : index
    %189 = vector.load %arg10[%c0_59, %c0_60] : memref<1x32xf32, #tpu.memory_space<vmem>>, vector<1x32xf32>
    %190 = vector.broadcast %189 : vector<1x32xf32> to vector<16x32xf32>
    %191 = arith.mulf %188, %190 : vector<16x32xf32>
    %c0_61 = arith.constant 0 : index
    %c0_62 = arith.constant 0 : index
    %192 = vector.load %arg11[%c0_61, %c0_62] : memref<1x32xf32, #tpu.memory_space<vmem>>, vector<1x32xf32>
    %193 = vector.broadcast %192 : vector<1x32xf32> to vector<16x32xf32>
    %194 = arith.addf %191, %193 : vector<16x32xf32>
    %195 = arith.truncf %194 : vector<16x32xf32> to vector<16x32xbf16>
    %c0_63 = arith.constant 0 : index
    %c0_64 = arith.constant 0 : index
    %196 = vector.load %arg12[%c0_63, %c0_64] : memref<32x64xbf16, #tpu.memory_space<vmem>>, vector<32x64xbf16>
    %cst_65 = arith.constant dense<0.000000e+00> : vector<16x64xf32>
    %197 = tpu.matmul %195, %196, %cst_65 {dimension_numbers = #tpu.dot_dimension_numbers<[1], [0], [0], [1], [0, 0, 1, 1], [], []>} : vector<16x32xbf16>, vector<32x64xbf16>, vector<16x64xf32> -> vector<16x64xf32>
    %c0_66 = arith.constant 0 : index
    %c0_67 = arith.constant 0 : index
    %198 = vector.load %arg13[%c0_66, %c0_67] : memref<1x64xf32, #tpu.memory_space<vmem>>, vector<1x64xf32>
    %199 = vector.broadcast %198 : vector<1x64xf32> to vector<16x64xf32>
    %200 = arith.addf %197, %199 : vector<16x64xf32>
    %201 = arith.negf %200 : vector<16x64xf32>
    %202 = math.exp %201 : vector<16x64xf32>
    %cst_68 = arith.constant 1.000000e+00 : f32
    %203 = vector.broadcast %cst_68 : f32 to vector<16x64xf32>
    %204 = arith.addf %203, %202 : vector<16x64xf32>
    %205 = arith.divf %203, %204 : vector<16x64xf32>
    %206 = arith.mulf %200, %205 : vector<16x64xf32>
    %207 = arith.truncf %206 : vector<16x64xf32> to vector<16x64xbf16>
    %c0_69 = arith.constant 0 : index
    %c0_70 = arith.constant 0 : index
    %208 = vector.load %arg14[%c0_69, %c0_70] : memref<64x32xbf16, #tpu.memory_space<vmem>>, vector<64x32xbf16>
    %cst_71 = arith.constant dense<0.000000e+00> : vector<16x32xf32>
    %209 = tpu.matmul %207, %208, %cst_71 {dimension_numbers = #tpu.dot_dimension_numbers<[1], [0], [0], [1], [0, 0, 1, 1], [], []>} : vector<16x64xbf16>, vector<64x32xbf16>, vector<16x32xf32> -> vector<16x32xf32>
    %c0_72 = arith.constant 0 : index
    %c0_73 = arith.constant 0 : index
    %210 = vector.load %arg15[%c0_72, %c0_73] : memref<1x32xf32, #tpu.memory_space<vmem>>, vector<1x32xf32>
    %211 = vector.broadcast %210 : vector<1x32xf32> to vector<16x32xf32>
    %212 = arith.addf %209, %211 : vector<16x32xf32>
    %213 = arith.addf %212, %194 : vector<16x32xf32>
    %cst_74 = arith.constant dense<0.000000e+00> : vector<16xf32>
    %214 = vector.multi_reduction <add>, %213, %cst_74 [1] : vector<16x32xf32> to vector<16xf32>
    %215 = vector.shape_cast %214 : vector<16xf32> to vector<16x1xf32>
    %cst_75 = arith.constant 3.200000e+01 : f32
    %216 = vector.broadcast %cst_75 : f32 to vector<16x1xf32>
    %217 = arith.divf %215, %216 : vector<16x1xf32>
    %218 = vector.broadcast %217 : vector<16x1xf32> to vector<16x32xf32>
    %219 = arith.subf %213, %218 : vector<16x32xf32>
    %220 = arith.mulf %219, %219 : vector<16x32xf32>
    %cst_76 = arith.constant dense<0.000000e+00> : vector<16xf32>
    %221 = vector.multi_reduction <add>, %220, %cst_76 [1] : vector<16x32xf32> to vector<16xf32>
    %222 = vector.shape_cast %221 : vector<16xf32> to vector<16x1xf32>
    %cst_77 = arith.constant 3.200000e+01 : f32
    %223 = vector.broadcast %cst_77 : f32 to vector<16x1xf32>
    %224 = arith.divf %222, %223 : vector<16x1xf32>
    %cst_78 = arith.constant 9.99999974E-6 : f32
    %225 = vector.broadcast %cst_78 : f32 to vector<16x1xf32>
    %226 = arith.addf %224, %225 : vector<16x1xf32>
    %227 = math.rsqrt %226 : vector<16x1xf32>
    %228 = vector.broadcast %227 : vector<16x1xf32> to vector<16x32xf32>
    %229 = arith.mulf %219, %228 : vector<16x32xf32>
    %c0_79 = arith.constant 0 : index
    %c0_80 = arith.constant 0 : index
    %230 = vector.load %arg16[%c0_79, %c0_80] : memref<1x32xf32, #tpu.memory_space<vmem>>, vector<1x32xf32>
    %231 = vector.broadcast %230 : vector<1x32xf32> to vector<16x32xf32>
    %232 = arith.mulf %229, %231 : vector<16x32xf32>
    %c0_81 = arith.constant 0 : index
    %c0_82 = arith.constant 0 : index
    %233 = vector.load %arg17[%c0_81, %c0_82] : memref<1x32xf32, #tpu.memory_space<vmem>>, vector<1x32xf32>
    %234 = vector.broadcast %233 : vector<1x32xf32> to vector<16x32xf32>
    %235 = arith.addf %232, %234 : vector<16x32xf32>
    %236 = vector.shape_cast %235 : vector<16x32xf32> to vector<2x8x32xf32>
    %c0_83 = arith.constant 0 : index
    %c0_84 = arith.constant 0 : index
    %c0_85 = arith.constant 0 : index
    %237 = vector.load %arg18[%c0_83, %c0_84, %c0_85] : memref<2x8x32xf32, #tpu.memory_space<vmem>>, vector<2x8x32xf32>
    tpu.vector_store %arg18[%c0_83, %c0_84, %c0_85], %236 {strides = array<i32>} : memref<2x8x32xf32, #tpu.memory_space<vmem>>, vector<2x8x32xf32>,
    return
  }
  func.func @transform_0(%arg0: i32) -> (i32, i32, i32) {
    %c0_i32 = arith.constant 0 : i32
    %c0_i32_0 = arith.constant 0 : i32
    %c0_i32_1 = arith.constant 0 : i32
    return %arg0, %c0_i32, %c0_i32_0 : i32, i32, i32
  }
  func.func @transform_1(%arg0: i32) -> (i32, i32, i32) {
    %c0_i32 = arith.constant 0 : i32
    %c0_i32_0 = arith.constant 0 : i32
    %c0_i32_1 = arith.constant 0 : i32
    return %arg0, %c0_i32, %c0_i32_0 : i32, i32, i32
  }
  func.func @transform_2(%arg0: i32) -> (i32, i32, i32) {
    %c0_i32 = arith.constant 0 : i32
    %c0_i32_0 = arith.constant 0 : i32
    %c0_i32_1 = arith.constant 0 : i32
    return %arg0, %c0_i32, %c0_i32_0 : i32, i32, i32
  }
  func.func @transform_3(%arg0: i32) -> (i32, i32) {
    %c0_i32 = arith.constant 0 : i32
    %c0_i32_0 = arith.constant 0 : i32
    %c0_i32_1 = arith.constant 0 : i32
    return %c0_i32, %c0_i32_0 : i32, i32
  }
  func.func @transform_4(%arg0: i32) -> (i32, i32) {
    %c0_i32 = arith.constant 0 : i32
    %c0_i32_0 = arith.constant 0 : i32
    %c0_i32_1 = arith.constant 0 : i32
    return %c0_i32, %c0_i32_0 : i32, i32
  }
  func.func @transform_5(%arg0: i32) -> (i32, i32) {
    %c0_i32 = arith.constant 0 : i32
    %c0_i32_0 = arith.constant 0 : i32
    %c0_i32_1 = arith.constant 0 : i32
    return %c0_i32, %c0_i32_0 : i32, i32
  }
  func.func @transform_6(%arg0: i32) -> (i32, i32) {
    %c0_i32 = arith.constant 0 : i32
    %c0_i32_0 = arith.constant 0 : i32
    %c0_i32_1 = arith.constant 0 : i32
    return %c0_i32, %c0_i32_0 : i32, i32
  }
  func.func @transform_7(%arg0: i32) -> (i32, i32) {
    %c0_i32 = arith.constant 0 : i32
    %c0_i32_0 = arith.constant 0 : i32
    %c0_i32_1 = arith.constant 0 : i32
    return %c0_i32, %c0_i32_0 : i32, i32
  }
  func.func @transform_8(%arg0: i32) -> (i32, i32) {
    %c0_i32 = arith.constant 0 : i32
    %c0_i32_0 = arith.constant 0 : i32
    %c0_i32_1 = arith.constant 0 : i32
    return %c0_i32, %c0_i32_0 : i32, i32
  }
  func.func @transform_9(%arg0: i32) -> (i32, i32) {
    %c0_i32 = arith.constant 0 : i32
    %c0_i32_0 = arith.constant 0 : i32
    %c0_i32_1 = arith.constant 0 : i32
    return %c0_i32, %c0_i32_0 : i32, i32
  }
  func.func @transform_10(%arg0: i32) -> (i32, i32) {
    %c0_i32 = arith.constant 0 : i32
    %c0_i32_0 = arith.constant 0 : i32
    %c0_i32_1 = arith.constant 0 : i32
    return %c0_i32, %c0_i32_0 : i32, i32
  }
  func.func @transform_11(%arg0: i32) -> (i32, i32) {
    %c0_i32 = arith.constant 0 : i32
    %c0_i32_0 = arith.constant 0 : i32
    %c0_i32_1 = arith.constant 0 : i32
    return %c0_i32, %c0_i32_0 : i32, i32
  }
  func.func @transform_12(%arg0: i32) -> (i32, i32) {
    %c0_i32 = arith.constant 0 : i32
    %c0_i32_0 = arith.constant 0 : i32
    %c0_i32_1 = arith.constant 0 : i32
    return %c0_i32, %c0_i32_0 : i32, i32
  }
  func.func @transform_13(%arg0: i32) -> (i32, i32) {
    %c0_i32 = arith.constant 0 : i32
    %c0_i32_0 = arith.constant 0 : i32
    %c0_i32_1 = arith.constant 0 : i32
    return %c0_i32, %c0_i32_0 : i32, i32
  }
  func.func @transform_14(%arg0: i32) -> (i32, i32) {
    %c0_i32 = arith.constant 0 : i32
    %c0_i32_0 = arith.constant 0 : i32
    %c0_i32_1 = arith.constant 0 : i32
    return %c0_i32, %c0_i32_0 : i32, i32
  }
  func.func @transform_15(%arg0: i32) -> (i32, i32) {
    %c0_i32 = arith.constant 0 : i32
    %c0_i32_0 = arith.constant 0 : i32
    %c0_i32_1 = arith.constant 0 : i32
    return %c0_i32, %c0_i32_0 : i32, i32
  }
  func.func @transform_16(%arg0: i32) -> (i32, i32) {
    %c0_i32 = arith.constant 0 : i32
    %c0_i32_0 = arith.constant 0 : i32
    %c0_i32_1 = arith.constant 0 : i32
    return %c0_i32, %c0_i32_0 : i32, i32
  }
  func.func @transform_17(%arg0: i32) -> (i32, i32, i32) {
    %c0_i32 = arith.constant 0 : i32
    %c0_i32_0 = arith.constant 0 : i32
    %c0_i32_1 = arith.constant 0 : i32
    return %arg0, %c0_i32, %c0_i32_0 : i32, i32, i32
  }
}

</mosaic_0001>

<llo_original>
// kernel: tpu_custom_call.1
$region0: #{tpu_custom_call.1}
  #allocation0 [shape = 'u32[]', space=smem, size = 0x4, offset = 0x4, fixed_abs, tag = 'smem constant byte address 0x4 - core index']
  #allocation1 [shape = 'u32[144,128]{1,0:T(1,128)}', space=vmem, size = 0x12000, scoped, tag = 'internal scratch']
  %s0 = inlined_call_operand.hbm [shape: f32[2,8,32], index: 0, kind: input, shape index: {}]
  %s1 = inlined_call_operand.hbm [shape: bf16[2,16,32], index: 1, kind: input, shape index: {}]
  %s2 = inlined_call_operand.hbm [shape: f32[2,1,16], index: 2, kind: input, shape index: {}]
  %s3 = inlined_call_operand.hbm [shape: bf16[32,32], index: 3, kind: input, shape index: {}]
  %s4 = inlined_call_operand.hbm [shape: bf16[32,64], index: 4, kind: input, shape index: {}]
  %s5 = inlined_call_operand.hbm [shape: bf16[32,32], index: 5, kind: input, shape index: {}]
  %s6 = inlined_call_operand.hbm [shape: f32[1,32], index: 6, kind: input, shape index: {}]
  %s7 = inlined_call_operand.hbm [shape: f32[1,64], index: 7, kind: input, shape index: {}]
  %s8 = inlined_call_operand.hbm [shape: f32[1,32], index: 8, kind: input, shape index: {}]
  %s9 = inlined_call_operand.hbm [shape: f32[1,32], index: 9, kind: input, shape index: {}]
  %s10 = inlined_call_operand.hbm [shape: f32[1,32], index: 10, kind: input, shape index: {}]
  %s11 = inlined_call_operand.hbm [shape: bf16[32,64], index: 11, kind: input, shape index: {}]
  %s12 = inlined_call_operand.hbm [shape: f32[1,64], index: 12, kind: input, shape index: {}]
  %s13 = inlined_call_operand.hbm [shape: bf16[64,32], index: 13, kind: input, shape index: {}]
  %s14 = inlined_call_operand.hbm [shape: f32[1,32], index: 14, kind: input, shape index: {}]
  %s15 = inlined_call_operand.hbm [shape: f32[1,32], index: 15, kind: input, shape index: {}]
  %s16 = inlined_call_operand.hbm [shape: f32[1,32], index: 16, kind: input, shape index: {}]
  %s17 = inlined_call_operand.hbm [shape: f32[2,8,32], index: 17, kind: output, shape index: {}]
  %s18 = sld [smem:[#allocation0]]
  $region146: #{tpu_custom_call.1} parent=0
    _
  %s20 = ssub.s32 1, %s18
  %s21 = scalar_select 0, %s20, %s18
  $region1: #{tpu_custom_call.1} parent=0
    #allocation2 [shape = 'u8[8192]{0}', space=vmem, size = 0x2000, scoped, tag = 'input window, operand 0, single buffered']
    #allocation3 [shape = 's32[1]{0}', space=sflag, size = 0x4, scoped, tag = 'scoped memory for tpu_custom_call.1']
    #allocation4 [shape = 's32[1]{0}', space=sflag, size = 0x4, scoped, tag = 'scoped memory for tpu_custom_call.1']
    #allocation5 [shape = 'u8[8192]{0}', space=vmem, size = 0x2000, scoped, tag = 'input window, operand 1, single buffered']
    #allocation6 [shape = 's32[1]{0}', space=sflag, size = 0x4, scoped, tag = 'scoped memory for tpu_custom_call.1']
    #allocation7 [shape = 'u8[1024]{0}', space=vmem, size = 0x400, scoped, tag = 'input window, operand 2, single buffered']
    #allocation8 [shape = 'u8[8192]{0}', space=vmem, size = 0x2000, scoped, tag = 'input window, operand 3, single buffered']
    #allocation9 [shape = 's32[1]{0}', space=sflag, size = 0x4, scoped, tag = 'scoped memory for tpu_custom_call.1']
    #allocation10 [shape = 'u8[8192]{0}', space=vmem, size = 0x2000, scoped, tag = 'input window, operand 4, single buffered']
    #allocation11 [shape = 'u8[8192]{0}', space=vmem, size = 0x2000, scoped, tag = 'input window, operand 5, single buffered']
    #allocation12 [shape = 's32[1]{0}', space=sflag, size = 0x4, scoped, tag = 'scoped memory for tpu_custom_call.1']
    #allocation13 [shape = 'u8[512]{0}', space=vmem, size = 0x400, scoped, tag = 'input window, operand 6, single buffered']
    #allocation14 [shape = 'u8[512]{0}', space=vmem, size = 0x400, scoped, tag = 'input window, operand 7, single buffered']
    #allocation15 [shape = 's32[1]{0}', space=sflag, size = 0x4, scoped, tag = 'scoped memory for tpu_custom_call.1']
    #allocation16 [shape = 'u8[512]{0}', space=vmem, size = 0x400, scoped, tag = 'input window, operand 8, single buffered']
    #allocation17 [shape = 'u8[512]{0}', space=vmem, size = 0x400, scoped, tag = 'input window, operand 9, single buffered']
    #allocation18 [shape = 's32[1]{0}', space=sflag, size = 0x4, scoped, tag = 'scoped memory for tpu_custom_call.1']
    #allocation19 [shape = 'u8[512]{0}', space=vmem, size = 0x400, scoped, tag = 'input window, operand 10, single buffered']
    #allocation20 [shape = 'u8[8192]{0}', space=vmem, size = 0x2000, scoped, tag = 'input window, operand 11, single buffered']
    #allocation21 [shape = 's32[1]{0}', space=sflag, size = 0x4, scoped, tag = 'scoped memory for tpu_custom_call.1']
    #allocation22 [shape = 'u8[512]{0}', space=vmem, size = 0x400, scoped, tag = 'input window, operand 12, single buffered']
    #allocation23 [shape = 'u8[16384]{0}', space=vmem, size = 0x4000, scoped, tag = 'input window, operand 13, single buffered']
    #allocation24 [shape = 's32[1]{0}', space=sflag, size = 0x4, scoped, tag = 'scoped memory for tpu_custom_call.1']
    #allocation25 [shape = 'u8[512]{0}', space=vmem, size = 0x400, scoped, tag = 'input window, operand 14, single buffered']
    #allocation26 [shape = 'u8[512]{0}', space=vmem, size = 0x400, scoped, tag = 'input window, operand 15, single buffered']
    #allocation27 [shape = 's32[1]{0}', space=sflag, size = 0x4, scoped, tag = 'scoped memory for tpu_custom_call.1']
    #allocation28 [shape = 'u8[512]{0}', space=vmem, size = 0x400, scoped, tag = 'input window, operand 16, single buffered']
    #allocation29 [shape = 'u8[8192]{0}', space=vmem, size = 0x2000, scoped, tag = 'output window, operand 0, single buffered']
    %22 = vsyncpa [#allocation3], 0
    %23 = vsyncpa [#allocation6], 0
    %24 = vsyncpa [#allocation9], 0
    %25 = vsyncpa [#allocation12], 0
    %26 = vsyncpa [#allocation15], 0
    %27 = vsyncpa [#allocation18], 0
    %28 = vsyncpa [#allocation21], 0
    %29 = vsyncpa [#allocation24], 0
    %30 = vsyncpa [#allocation27], 0
    %31 = vsyncpa [#allocation4], 0
    // Predicated region
    $region2: #{tpu_custom_call.1} parent=1 // pred_check
      _
    $region3: #{tpu_custom_call.1} parent=1 // pred_check_branch
      %33 = sbr.rel (0) target = $region5
    $region4: #{tpu_custom_call.1} parent=1 // pred_region
      %s35 = ssub.s32 256, 256
      %36 = vsyncadd [#allocation3], %s35
      %s37 = sshll.u32 [#allocation2], 4
      %s38 = int_to_ptr.vmem [resolvable:$true] %s37
      %43 = dma.hbm_to_vmem [thread:$0]  %s0, 256, %s38, [#allocation3], 128, 128, 8
    $region5: #{tpu_custom_call.1} parent=1 // pred_fallthru
      _
    // Predicated region
    $region6: #{tpu_custom_call.1} parent=1 // pred_check
      _
    $region7: #{tpu_custom_call.1} parent=1 // pred_check_branch
      %45 = sbr.rel (0) target = $region9
    $region8: #{tpu_custom_call.1} parent=1 // pred_region
      %s47 = ssub.s32 256, 256
      %48 = vsyncadd [#allocation6], %s47
      %s49 = sshll.u32 [#allocation5], 4
      %s50 = int_to_ptr.vmem [resolvable:$true] %s49
      %55 = dma.hbm_to_vmem [thread:$0]  %s1, 256, %s50, [#allocation6], 64, 64, 4
    $region9: #{tpu_custom_call.1} parent=1 // pred_fallthru
      _
    // Predicated region
    $region10: #{tpu_custom_call.1} parent=1 // pred_check
      _
    $region11: #{tpu_custom_call.1} parent=1 // pred_check_branch
      %57 = sbr.rel (0) target = $region13
    $region12: #{tpu_custom_call.1} parent=1 // pred_region
      %s59 = ssub.s32 32, 32
      %60 = vsyncadd [#allocation6], %s59
      %s61 = sshll.u32 [#allocation7], 4
      %s62 = int_to_ptr.vmem [resolvable:$true] %s61
      %67 = dma.hbm_to_vmem [thread:$0]  %s2, 32, %s62, [#allocation6], 16, 16, 1
    $region13: #{tpu_custom_call.1} parent=1 // pred_fallthru
      _
    // Predicated region
    $region14: #{tpu_custom_call.1} parent=1 // pred_check
      _
    $region15: #{tpu_custom_call.1} parent=1 // pred_check_branch
      %69 = sbr.rel (0) target = $region17
    $region16: #{tpu_custom_call.1} parent=1 // pred_region
      %s71 = ssub.s32 256, 256
      %72 = vsyncadd [#allocation9], %s71
      %s73 = sshll.u32 [#allocation8], 4
      %s74 = int_to_ptr.vmem [resolvable:$true] %s73
      %79 = dma.hbm_to_vmem [thread:$0]  %s3, 256, %s74, [#allocation9], 64, 64, 4
    $region17: #{tpu_custom_call.1} parent=1 // pred_fallthru
      _
    // Predicated region
    $region18: #{tpu_custom_call.1} parent=1 // pred_check
      _
    $region19: #{tpu_custom_call.1} parent=1 // pred_check_branch
      %81 = sbr.rel (0) target = $region21
    $region20: #{tpu_custom_call.1} parent=1 // pred_region
      %s83 = ssub.s32 256, 256
      %84 = vsyncadd [#allocation9], %s83
      %s85 = sshll.u32 [#allocation10], 4
      %s86 = int_to_ptr.vmem [resolvable:$true] %s85
      %91 = dma.hbm_to_vmem [thread:$0]  %s4, 256, %s86, [#allocation9], 64, 64, 4
    $region21: #{tpu_custom_call.1} parent=1 // pred_fallthru
      _
    // Predicated region
    $region22: #{tpu_custom_call.1} parent=1 // pred_check
      _
    $region23: #{tpu_custom_call.1} parent=1 // pred_check_branch
      %93 = sbr.rel (0) target = $region25
    $region24: #{tpu_custom_call.1} parent=1 // pred_region
      %s95 = ssub.s32 256, 256
      %96 = vsyncadd [#allocation12], %s95
      %s97 = sshll.u32 [#allocation11], 4
      %s98 = int_to_ptr.vmem [resolvable:$true] %s97
      %103 = dma.hbm_to_vmem [thread:$0]  %s5, 256, %s98, [#allocation12], 64, 64, 4
    $region25: #{tpu_custom_call.1} parent=1 // pred_fallthru
      _
    // Predicated region
    $region26: #{tpu_custom_call.1} parent=1 // pred_check
      _
    $region27: #{tpu_custom_call.1} parent=1 // pred_check_branch
      %105 = sbr.rel (0) target = $region29
    $region28: #{tpu_custom_call.1} parent=1 // pred_region
      %s107 = ssub.s32 16, 16
      %108 = vsyncadd [#allocation12], %s107
      %s110 = sshll.u32 [#allocation13], 4
      %s111 = int_to_ptr.vmem [resolvable:$true] %s110
      %113 = dma.hbm_to_vmem [thread:$0]  %s6, 16, %s111, [#allocation12]
    $region29: #{tpu_custom_call.1} parent=1 // pred_fallthru
      _
    // Predicated region
    $region30: #{tpu_custom_call.1} parent=1 // pred_check
      _
    $region31: #{tpu_custom_call.1} parent=1 // pred_check_branch
      %115 = sbr.rel (0) target = $region33
    $region32: #{tpu_custom_call.1} parent=1 // pred_region
      %s117 = ssub.s32 16, 16
      %118 = vsyncadd [#allocation15], %s117
      %s120 = sshll.u32 [#allocation14], 4
      %s121 = int_to_ptr.vmem [resolvable:$true] %s120
      %123 = dma.hbm_to_vmem [thread:$0]  %s7, 16, %s121, [#allocation15]
    $region33: #{tpu_custom_call.1} parent=1 // pred_fallthru
      _
    // Predicated region
    $region34: #{tpu_custom_call.1} parent=1 // pred_check
      _
    $region35: #{tpu_custom_call.1} parent=1 // pred_check_branch
      %125 = sbr.rel (0) target = $region37
    $region36: #{tpu_custom_call.1} parent=1 // pred_region
      %s127 = ssub.s32 16, 16
      %128 = vsyncadd [#allocation15], %s127
      %s130 = sshll.u32 [#allocation16], 4
      %s131 = int_to_ptr.vmem [resolvable:$true] %s130
      %133 = dma.hbm_to_vmem [thread:$0]  %s8, 16, %s131, [#allocation15]
    $region37: #{tpu_custom_call.1} parent=1 // pred_fallthru
      _
    // Predicated region
    $region38: #{tpu_custom_call.1} parent=1 // pred_check
      _
    $region39: #{tpu_custom_call.1} parent=1 // pred_check_branch
      %135 = sbr.rel (0) target = $region41
    $region40: #{tpu_custom_call.1} parent=1 // pred_region
      %s137 = ssub.s32 16, 16
      %138 = vsyncadd [#allocation18], %s137
      %s140 = sshll.u32 [#allocation17], 4
      %s141 = int_to_ptr.vmem [resolvable:$true] %s140
      %143 = dma.hbm_to_vmem [thread:$0]  %s9, 16, %s141, [#allocation18]
    $region41: #{tpu_custom_call.1} parent=1 // pred_fallthru
      _
    // Predicated region
    $region42: #{tpu_custom_call.1} parent=1 // pred_check
      _
    $region43: #{tpu_custom_call.1} parent=1 // pred_check_branch
      %145 = sbr.rel (0) target = $region45
    $region44: #{tpu_custom_call.1} parent=1 // pred_region
      %s147 = ssub.s32 16, 16
      %148 = vsyncadd [#allocation18], %s147
      %s150 = sshll.u32 [#allocation19], 4
      %s151 = int_to_ptr.vmem [resolvable:$true] %s150
      %153 = dma.hbm_to_vmem [thread:$0]  %s10, 16, %s151, [#allocation18]
    $region45: #{tpu_custom_call.1} parent=1 // pred_fallthru
      _
    // Predicated region
    $region46: #{tpu_custom_call.1} parent=1 // pred_check
      _
    $region47: #{tpu_custom_call.1} parent=1 // pred_check_branch
      %155 = sbr.rel (0) target = $region49
    $region48: #{tpu_custom_call.1} parent=1 // pred_region
      %s157 = ssub.s32 256, 256
      %158 = vsyncadd [#allocation21], %s157
      %s159 = sshll.u32 [#allocation20], 4
      %s160 = int_to_ptr.vmem [resolvable:$true] %s159
      %165 = dma.hbm_to_vmem [thread:$0]  %s11, 256, %s160, [#allocation21], 64, 64, 4
    $region49: #{tpu_custom_call.1} parent=1 // pred_fallthru
      _
    // Predicated region
    $region50: #{tpu_custom_call.1} parent=1 // pred_check
      _
    $region51: #{tpu_custom_call.1} parent=1 // pred_check_branch
      %167 = sbr.rel (0) target = $region53
    $region52: #{tpu_custom_call.1} parent=1 // pred_region
      %s169 = ssub.s32 16, 16
      %170 = vsyncadd [#allocation21], %s169
      %s172 = sshll.u32 [#allocation22], 4
      %s173 = int_to_ptr.vmem [resolvable:$true] %s172
      %175 = dma.hbm_to_vmem [thread:$0]  %s12, 16, %s173, [#allocation21]
    $region53: #{tpu_custom_call.1} parent=1 // pred_fallthru
      _
    // Predicated region
    $region54: #{tpu_custom_call.1} parent=1 // pred_check
      _
    $region55: #{tpu_custom_call.1} parent=1 // pred_check_branch
      %177 = sbr.rel (0) target = $region57
    $region56: #{tpu_custom_call.1} parent=1 // pred_region
      %s179 = ssub.s32 512, 512
      %180 = vsyncadd [#allocation24], %s179
      %s181 = sshll.u32 [#allocation23], 4
      %s182 = int_to_ptr.vmem [resolvable:$true] %s181
      %187 = dma.hbm_to_vmem [thread:$0]  %s13, 512, %s182, [#allocation24], 64, 64, 4
    $region57: #{tpu_custom_call.1} parent=1 // pred_fallthru
      _
    // Predicated region
    $region58: #{tpu_custom_call.1} parent=1 // pred_check
      _
    $region59: #{tpu_custom_call.1} parent=1 // pred_check_branch
      %189 = sbr.rel (0) target = $region61
    $region60: #{tpu_custom_call.1} parent=1 // pred_region
      %s191 = ssub.s32 16, 16
      %192 = vsyncadd [#allocation24], %s191
      %s194 = sshll.u32 [#allocation25], 4
      %s195 = int_to_ptr.vmem [resolvable:$true] %s194
      %197 = dma.hbm_to_vmem [thread:$0]  %s14, 16, %s195, [#allocation24]
    $region61: #{tpu_custom_call.1} parent=1 // pred_fallthru
      _
    // Predicated region
    $region62: #{tpu_custom_call.1} parent=1 // pred_check
      _
    $region63: #{tpu_custom_call.1} parent=1 // pred_check_branch
      %199 = sbr.rel (0) target = $region65
    $region64: #{tpu_custom_call.1} parent=1 // pred_region
      %s201 = ssub.s32 16, 16
      %202 = vsyncadd [#allocation27], %s201
      %s204 = sshll.u32 [#allocation26], 4
      %s205 = int_to_ptr.vmem [resolvable:$true] %s204
      %207 = dma.hbm_to_vmem [thread:$0]  %s15, 16, %s205, [#allocation27]
    $region65: #{tpu_custom_call.1} parent=1 // pred_fallthru
      _
    // Predicated region
    $region66: #{tpu_custom_call.1} parent=1 // pred_check
      _
    $region67: #{tpu_custom_call.1} parent=1 // pred_check_branch
      %209 = sbr.rel (0) target = $region69
    $region68: #{tpu_custom_call.1} parent=1 // pred_region
      %s211 = ssub.s32 16, 16
      %212 = vsyncadd [#allocation27], %s211
      %s214 = sshll.u32 [#allocation28], 4
      %s215 = int_to_ptr.vmem [resolvable:$true] %s214
      %217 = dma.hbm_to_vmem [thread:$0]  %s16, 16, %s215, [#allocation27]
    $region69: #{tpu_custom_call.1} parent=1 // pred_fallthru
      _
    // Predicated region
    $region70: #{tpu_custom_call.1} parent=1 // pred_check
      _
    $region71: #{tpu_custom_call.1} parent=1 // pred_check_branch
      %219 = sbr.rel (0) target = $region73
    $region72: #{tpu_custom_call.1} parent=1 // pred_region
      %220 = dma.done [#allocation3], 256
    $region73: #{tpu_custom_call.1} parent=1 // pred_fallthru
      _
    // Predicated region
    $region74: #{tpu_custom_call.1} parent=1 // pred_check
      _
    $region75: #{tpu_custom_call.1} parent=1 // pred_check_branch
      %222 = sbr.rel (0) target = $region77
    $region76: #{tpu_custom_call.1} parent=1 // pred_region
      %223 = dma.done [#allocation6], 256
    $region77: #{tpu_custom_call.1} parent=1 // pred_fallthru
      _
    // Predicated region
    $region78: #{tpu_custom_call.1} parent=1 // pred_check
      _
    $region79: #{tpu_custom_call.1} parent=1 // pred_check_branch
      %225 = sbr.rel (0) target = $region81
    $region80: #{tpu_custom_call.1} parent=1 // pred_region
      %226 = dma.done [#allocation6], 32
    $region81: #{tpu_custom_call.1} parent=1 // pred_fallthru
      _
    // Predicated region
    $region82: #{tpu_custom_call.1} parent=1 // pred_check
      _
    $region83: #{tpu_custom_call.1} parent=1 // pred_check_branch
      %228 = sbr.rel (0) target = $region85
    $region84: #{tpu_custom_call.1} parent=1 // pred_region
      %229 = dma.done [#allocation9], 256
    $region85: #{tpu_custom_call.1} parent=1 // pred_fallthru
      _
    // Predicated region
    $region86: #{tpu_custom_call.1} parent=1 // pred_check
      _
    $region87: #{tpu_custom_call.1} parent=1 // pred_check_branch
      %231 = sbr.rel (0) target = $region89
    $region88: #{tpu_custom_call.1} parent=1 // pred_region
      %232 = dma.done [#allocation9], 256
    $region89: #{tpu_custom_call.1} parent=1 // pred_fallthru
      _
    // Predicated region
    $region90: #{tpu_custom_call.1} parent=1 // pred_check
      _
    $region91: #{tpu_custom_call.1} parent=1 // pred_check_branch
      %234 = sbr.rel (0) target = $region93
    $region92: #{tpu_custom_call.1} parent=1 // pred_region
      %235 = dma.done [#allocation12], 256
    $region93: #{tpu_custom_call.1} parent=1 // pred_fallthru
      _
    // Predicated region
    $region94: #{tpu_custom_call.1} parent=1 // pred_check
      _
    $region95: #{tpu_custom_call.1} parent=1 // pred_check_branch
      %237 = sbr.rel (0) target = $region97
    $region96: #{tpu_custom_call.1} parent=1 // pred_region
      %238 = dma.done [#allocation12], 16
    $region97: #{tpu_custom_call.1} parent=1 // pred_fallthru
      _
    // Predicated region
    $region98: #{tpu_custom_call.1} parent=1 // pred_check
      _
    $region99: #{tpu_custom_call.1} parent=1 // pred_check_branch
      %240 = sbr.rel (0) target = $region101
    $region100: #{tpu_custom_call.1} parent=1 // pred_region
      %241 = dma.done [#allocation15], 16
    $region101: #{tpu_custom_call.1} parent=1 // pred_fallthru
      _
    // Predicated region
    $region102: #{tpu_custom_call.1} parent=1 // pred_check
      _
    $region103: #{tpu_custom_call.1} parent=1 // pred_check_branch
      %243 = sbr.rel (0) target = $region105
    $region104: #{tpu_custom_call.1} parent=1 // pred_region
      %244 = dma.done [#allocation15], 16
    $region105: #{tpu_custom_call.1} parent=1 // pred_fallthru
      _
    // Predicated region
    $region106: #{tpu_custom_call.1} parent=1 // pred_check
      _
    $region107: #{tpu_custom_call.1} parent=1 // pred_check_branch
      %246 = sbr.rel (0) target = $region109
    $region108: #{tpu_custom_call.1} parent=1 // pred_region
      %247 = dma.done [#allocation18], 16
    $region109: #{tpu_custom_call.1} parent=1 // pred_fallthru
      _
    // Predicated region
    $region110: #{tpu_custom_call.1} parent=1 // pred_check
      _
    $region111: #{tpu_custom_call.1} parent=1 // pred_check_branch
      %249 = sbr.rel (0) target = $region113
    $region112: #{tpu_custom_call.1} parent=1 // pred_region
      %250 = dma.done [#allocation18], 16
    $region113: #{tpu_custom_call.1} parent=1 // pred_fallthru
      _
    // Predicated region
    $region114: #{tpu_custom_call.1} parent=1 // pred_check
      _
    $region115: #{tpu_custom_call.1} parent=1 // pred_check_branch
      %252 = sbr.rel (0) target = $region117
    $region116: #{tpu_custom_call.1} parent=1 // pred_region
      %253 = dma.done [#allocation21], 256
    $region117: #{tpu_custom_call.1} parent=1 // pred_fallthru
      _
    // Predicated region
    $region118: #{tpu_custom_call.1} parent=1 // pred_check
      _
    $region119: #{tpu_custom_call.1} parent=1 // pred_check_branch
      %255 = sbr.rel (0) target = $region121
    $region120: #{tpu_custom_call.1} parent=1 // pred_region
      %256 = dma.done [#allocation21], 16
    $region121: #{tpu_custom_call.1} parent=1 // pred_fallthru
      _
    // Predicated region
    $region122: #{tpu_custom_call.1} parent=1 // pred_check
      _
    $region123: #{tpu_custom_call.1} parent=1 // pred_check_branch
      %258 = sbr.rel (0) target = $region125
    $region124: #{tpu_custom_call.1} parent=1 // pred_region
      %259 = dma.done [#allocation24], 512
    $region125: #{tpu_custom_call.1} parent=1 // pred_fallthru
      _
    // Predicated region
    $region126: #{tpu_custom_call.1} parent=1 // pred_check
      _
    $region127: #{tpu_custom_call.1} parent=1 // pred_check_branch
      %261 = sbr.rel (0) target = $region129
    $region128: #{tpu_custom_call.1} parent=1 // pred_region
      %262 = dma.done [#allocation24], 16
    $region129: #{tpu_custom_call.1} parent=1 // pred_fallthru
      _
    // Predicated region
    $region130: #{tpu_custom_call.1} parent=1 // pred_check
      _
    $region131: #{tpu_custom_call.1} parent=1 // pred_check_branch
      %264 = sbr.rel (0) target = $region133
    $region132: #{tpu_custom_call.1} parent=1 // pred_region
      %265 = dma.done [#allocation27], 16
    $region133: #{tpu_custom_call.1} parent=1 // pred_fallthru
      _
    // Predicated region
    $region134: #{tpu_custom_call.1} parent=1 // pred_check
      _
    $region135: #{tpu_custom_call.1} parent=1 // pred_check_branch
      %267 = sbr.rel (0) target = $region137
    $region136: #{tpu_custom_call.1} parent=1 // pred_region
      %268 = dma.done [#allocation27], 16
    $region137: #{tpu_custom_call.1} parent=1 // pred_fallthru
      _
    %v270 = vld [vmem:[#allocation2] sm:$0xff]
    %v271 = vld [vmem:[#allocation2 + $0x8] sm:$0xff]
    %v272 = vpack.c.bf16 %v271, %v270
    %v273 = vld [vmem:[#allocation5] sm:$0xf]
    %v274 = vld [vmem:[#allocation5 + $0x4] sm:$0xf]
    %v275 = vld [vmem:[#allocation5 + $0x8] sm:$0xf]
    %v276 = vld [vmem:[#allocation5 + $0xc] sm:$0xf]
    %v277 = vld [vmem:[#allocation8] sm:$0xf]
    %v278 = vld [vmem:[#allocation8 + $0x4] sm:$0xf]
    %v279 = vld [vmem:[#allocation8 + $0x8] sm:$0xf]
    %v280 = vld [vmem:[#allocation8 + $0xc] sm:$0xf]
    %v281 = vld [vmem:[#allocation13] sm:$0x1]
    %v283 = vlaneseq
    %v284 = vshrl.u32 %v283, 7
    %v285 = vsub.s32 0, %v284
    %v286 = vrot.slane %v281, %v285
    %v292 = vunpack.c.l.b16 %v277
    %v293 = vunpack.c.l.b16 %v278
    %v294 = vunpack.c.l.b16 %v279
    %v295 = vunpack.c.l.b16 %v280
    %v296 = vpack.c.b16 %v293, %v292
    %v297 = vpack.c.b16 %v295, %v294
    %vm300 = vcmask 261120
    %v302 = vsel %vm300, %v272, 0
    %304 = vmatprep.subr.bf16.mxu0 0
    %305 = vmatpush1.bf16.msra.mxu0 %v296
    %306 = vmatprep.subr.bf16.mxu0 0
    %307 = vmatpush1.bf16.msra.mxu0 %v297
    %308 = vmatprep.subr.bf16.mxu0 0
    %309 = vmatpush1.bf16.msra.mxu0 0
    %310 = vmatprep.subr.bf16.mxu0 0
    %311 = vmatpush1.bf16.msra.mxu0 0
    %312 = vmatprep.subr.bf16.mxu0 0
    %313 = vmatpush1.bf16.msra.mxu0 0
    %314 = vmatprep.subr.bf16.mxu0 0
    %315 = vmatpush1.bf16.msra.mxu0 0
    %316 = vmatprep.subr.bf16.mxu0 0
    %317 = vmatpush1.bf16.msra.mxu0 0
    %318 = vmatprep.subr.bf16.mxu0 0
    %319 = vmatpush1.bf16.msra.mxu0 0
    %320 = vmatprep.subr.bf16.mxu0 0
    %321 = vmatpush1.bf16.msra.mxu0 0
    %322 = vmatprep.subr.bf16.mxu0 0
    %323 = vmatpush1.bf16.msra.mxu0 0
    %324 = vmatprep.subr.bf16.mxu0 0
    %325 = vmatpush1.bf16.msra.mxu0 0
    %326 = vmatprep.subr.bf16.mxu0 0
    %327 = vmatpush1.bf16.msra.mxu0 0
    %328 = vmatprep.subr.bf16.mxu0 0
    %329 = vmatpush1.bf16.msra.mxu0 0
    %330 = vmatprep.subr.bf16.mxu0 0
    %331 = vmatpush1.bf16.msra.mxu0 0
    %332 = vmatprep.subr.bf16.mxu0 0
    %333 = vmatpush1.bf16.msra.mxu0 0
    %334 = vmatprep.subr.bf16.mxu0 0
    %335 = vmatpush1.bf16.msra.mxu0 0
    %336 = vmatprep.mubr.bf16.mxu0 0
    %337 = vmatmul.mubr.bf16.gmra.mrb[0].mxu0 %v302
    %v338 = vpop.f32.mrb[0].mxu0
    %v339 = vadd.f32 %v286, %v338
    %v340 = vpop.f32.mrb[0].mxu0
    %v341 = vpop.f32.mrb[0].mxu0
    %v342 = vadd.f32 %v286, %v341
    %v343 = vpop.f32.mrb[0].mxu0
    %344 = vdwg.mxu0
    %v345 = vld [vmem:[#allocation10] sm:$0xf]
    %v346 = vld [vmem:[#allocation10 + $0x4] sm:$0xf]
    %v347 = vld [vmem:[#allocation10 + $0x8] sm:$0xf]
    %v348 = vld [vmem:[#allocation10 + $0xc] sm:$0xf]
    %v349 = vld [vmem:[#allocation14] sm:$0x1]
    %v351 = vlaneseq
    %v352 = vshrl.u32 %v351, 7
    %v353 = vsub.s32 0, %v352
    %v354 = vrot.slane %v349, %v353
    %v360 = vunpack.c.l.b16 %v273
    %v361 = vunpack.c.l.b16 %v274
    %v362 = vunpack.c.l.b16 %v275
    %v363 = vunpack.c.l.b16 %v276
    %v364 = vpack.c.b16 %v361, %v360
    %v365 = vpack.c.b16 %v363, %v362
    %v370 = vunpack.c.l.b16 %v345
    %v371 = vunpack.c.l.b16 %v346
    %v372 = vunpack.c.l.b16 %v347
    %v373 = vunpack.c.l.b16 %v348
    %v374 = vpack.c.b16 %v371, %v370
    %v375 = vpack.c.b16 %v373, %v372
    %v379 = vsel %vm300, %v364, 0
    %v382 = vsel %vm300, %v365, 0
    %384 = vmatprep.subr.bf16.mxu0 0
    %385 = vmatpush1.bf16.msra.mxu0 %v374
    %386 = vmatprep.subr.bf16.mxu0 0
    %387 = vmatpush1.bf16.msra.mxu0 %v375
    %388 = vmatprep.subr.bf16.mxu0 0
    %389 = vmatpush1.bf16.msra.mxu0 0
    %390 = vmatprep.subr.bf16.mxu0 0
    %391 = vmatpush1.bf16.msra.mxu0 0
    %392 = vmatprep.subr.bf16.mxu0 0
    %393 = vmatpush1.bf16.msra.mxu0 0
    %394 = vmatprep.subr.bf16.mxu0 0
    %395 = vmatpush1.bf16.msra.mxu0 0
    %396 = vmatprep.subr.bf16.mxu0 0
    %397 = vmatpush1.bf16.msra.mxu0 0
    %398 = vmatprep.subr.bf16.mxu0 0
    %399 = vmatpush1.bf16.msra.mxu0 0
    %400 = vmatprep.subr.bf16.mxu0 0
    %401 = vmatpush1.bf16.msra.mxu0 0
    %402 = vmatprep.subr.bf16.mxu0 0
    %403 = vmatpush1.bf16.msra.mxu0 0
    %404 = vmatprep.subr.bf16.mxu0 0
    %405 = vmatpush1.bf16.msra.mxu0 0
    %406 = vmatprep.subr.bf16.mxu0 0
    %407 = vmatpush1.bf16.msra.mxu0 0
    %408 = vmatprep.subr.bf16.mxu0 0
    %409 = vmatpush1.bf16.msra.mxu0 0
    %410 = vmatprep.subr.bf16.mxu0 0
    %411 = vmatpush1.bf16.msra.mxu0 0
    %412 = vmatprep.subr.bf16.mxu0 0
    %413 = vmatpush1.bf16.msra.mxu0 0
    %414 = vmatprep.subr.bf16.mxu0 0
    %415 = vmatpush1.bf16.msra.mxu0 0
    %416 = vmatprep.mubr.bf16.mxu0 0
    %417 = vmatmul.mubr.bf16.gmra.mrb[0].mxu0 %v379
    %v418 = vpop.f32.mrb[0].mxu0
    %v419 = vadd.f32 %v354, %v418
    %v420 = vpop.f32.mrb[0].mxu0
    %v421 = vpop.f32.mrb[0].mxu0
    %v422 = vadd.f32 %v354, %v421
    %v423 = vpop.f32.mrb[0].mxu0
    %424 = vmatprep.mubr.bf16.mxu0 0
    %425 = vmatmul.mubr.bf16.gmra.mrb[0].mxu0 %v382
    %v426 = vpop.f32.mrb[0].mxu0
    %v427 = vadd.f32 %v354, %v426
    %v428 = vpop.f32.mrb[0].mxu0
    %v429 = vpop.f32.mrb[0].mxu0
    %v430 = vadd.f32 %v354, %v429
    %v431 = vpop.f32.mrb[0].mxu0
    %432 = vdwg.mxu0
    %v433 = vpack.c.bf16 %v342, %v339
    %v434 = vpack.c.bf16 %v422, %v419
    %v435 = vpack.c.bf16 %v430, %v427
    %v436 = vld [vmem:[#allocation7] sm:$0x1]
    %v437 = vld [vmem:[#allocation7 + $0x1] sm:$0x1]
    %v439 = vlaneseq
    %v440 = vshrl.u32 %v439, 7
    %v441 = vsub.s32 0, %v440
    %v442 = vrot.slane %v436, %v441
    %vm444 = vcmask 64512
    %v446 = vsel %vm444, %v433, 0
    %v449 = vsel %vm444, %v434, 0
    %451 = vmatprep.subr.bf16.mxu0 0
    %452 = vmatpush1.bf16.xpose.msra.mxu0 %v449
    %453 = vmatprep.subr.bf16.mxu0 0
    %454 = vmatpush1.bf16.xpose.msra.mxu0 0
    %455 = vmatprep.subr.bf16.mxu0 0
    %456 = vmatpush1.bf16.xpose.msra.mxu0 0
    %457 = vmatprep.subr.bf16.mxu0 0
    %458 = vmatpush1.bf16.xpose.msra.mxu0 0
    %459 = vmatprep.subr.bf16.mxu0 0
    %460 = vmatpush1.bf16.xpose.msra.mxu0 0
    %461 = vmatprep.subr.bf16.mxu0 0
    %462 = vmatpush1.bf16.xpose.msra.mxu0 0
    %463 = vmatprep.subr.bf16.mxu0 0
    %464 = vmatpush1.bf16.xpose.msra.mxu0 0
    %465 = vmatprep.subr.bf16.mxu0 0
    %466 = vmatpush1.bf16.xpose.msra.mxu0 0
    %467 = vmatprep.subr.bf16.mxu0 0
    %468 = vmatpush1.bf16.xpose.msra.mxu0 0
    %469 = vmatprep.subr.bf16.mxu0 0
    %470 = vmatpush1.bf16.xpose.msra.mxu0 0
    %471 = vmatprep.subr.bf16.mxu0 0
    %472 = vmatpush1.bf16.xpose.msra.mxu0 0
    %473 = vmatprep.subr.bf16.mxu0 0
    %474 = vmatpush1.bf16.xpose.msra.mxu0 0
    %475 = vmatprep.subr.bf16.mxu0 0
    %476 = vmatpush1.bf16.xpose.msra.mxu0 0
    %477 = vmatprep.subr.bf16.mxu0 0
    %478 = vmatpush1.bf16.xpose.msra.mxu0 0
    %479 = vmatprep.subr.bf16.mxu0 0
    %480 = vmatpush1.bf16.xpose.msra.mxu0 0
    %481 = vmatprep.subr.bf16.mxu0 0
    %482 = vmatpush1.bf16.xpose.msra.mxu0 0
    %483 = vmatprep.mubr.bf16.mxu0 0
    %484 = vmatmul.mubr.bf16.gmra.mrb[0].mxu0 %v446
    %v485 = vpop.f32.mrb[0].mxu0
    %v486 = vadd.f32 %v442, %v485
    %v487 = vpop.f32.mrb[0].mxu0
    %v488 = vpop.f32.mrb[0].mxu0
    %v489 = vpop.f32.mrb[0].mxu0
    %490 = vdwg.mxu0
    %vm491 = vcmask 130048
    %v492 = vsel %vm491, %v486, -inf
    %493 = vmax.xlane.f32.xlu0 %v492
    %v494 = vpop.xlane.xlu0 %493
    %v495 = vsub.f32 %v486, %v494
    %v496 = vmul.f32 %v495, 1.442695
    %v497 = vpow.pop %v496
    %v498 = vsel %vm491, %v497, 0.0
    %499 = vadd.xlane.f32.xlu0 %v498
    %v500 = vpop.xlane.xlu0 %499
    %v501 = vrcp.pop %v500
    %v502 = vmul.f32 %v497, %v501
    %v503 = vpack.c.bf16 %v502, %v502
    %505 = vrot.lane.b32.xlu0 %v434, 96
    %v506 = vpop.permute.xlu0 %505
    %v509 = vsel %vm491, %v503, 0
    %511 = vmatprep.subr.bf16.mxu0 0
    %512 = vmatpush1.bf16.msra.mxu0 %v506
    %513 = vmatprep.subr.bf16.mxu0 0
    %514 = vmatpush1.bf16.msra.mxu0 0
    %515 = vmatprep.subr.bf16.mxu0 0
    %516 = vmatpush1.bf16.msra.mxu0 0
    %517 = vmatprep.subr.bf16.mxu0 0
    %518 = vmatpush1.bf16.msra.mxu0 0
    %519 = vmatprep.subr.bf16.mxu0 0
    %520 = vmatpush1.bf16.msra.mxu0 0
    %521 = vmatprep.subr.bf16.mxu0 0
    %522 = vmatpush1.bf16.msra.mxu0 0
    %523 = vmatprep.subr.bf16.mxu0 0
    %524 = vmatpush1.bf16.msra.mxu0 0
    %525 = vmatprep.subr.bf16.mxu0 0
    %526 = vmatpush1.bf16.msra.mxu0 0
    %527 = vmatprep.subr.bf16.mxu0 0
    %528 = vmatpush1.bf16.msra.mxu0 0
    %529 = vmatprep.subr.bf16.mxu0 0
    %530 = vmatpush1.bf16.msra.mxu0 0
    %531 = vmatprep.subr.bf16.mxu0 0
    %532 = vmatpush1.bf16.msra.mxu0 0
    %533 = vmatprep.subr.bf16.mxu0 0
    %534 = vmatpush1.bf16.msra.mxu0 0
    %535 = vmatprep.subr.bf16.mxu0 0
    %536 = vmatpush1.bf16.msra.mxu0 0
    %537 = vmatprep.subr.bf16.mxu0 0
    %538 = vmatpush1.bf16.msra.mxu0 0
    %539 = vmatprep.subr.bf16.mxu0 0
    %540 = vmatpush1.bf16.msra.mxu0 0
    %541 = vmatprep.subr.bf16.mxu0 0
    %542 = vmatpush1.bf16.msra.mxu0 0
    %543 = vmatprep.mubr.bf16.mxu0 0
    %544 = vmatmul.mubr.bf16.gmra.mrb[0].mxu0 %v509
    %v545 = vpop.f32.mrb[0].mxu0
    %v546 = vadd.f32 0.0, %v545
    %v547 = vpop.f32.mrb[0].mxu0
    %v548 = vpop.f32.mrb[0].mxu0
    %v549 = vpop.f32.mrb[0].mxu0
    %550 = vdwg.mxu0
    %552 = vrot.lane.b32.xlu0 %v433, 120
    %v553 = vpop.permute.xlu0 %552
    %554 = vrot.lane.b32.xlu0 %v434, 120
    %v555 = vpop.permute.xlu0 %554
    %v557 = vsel %vm444, %v553, 0
    %v560 = vsel %vm444, %v555, 0
    %562 = vmatprep.subr.bf16.mxu0 0
    %563 = vmatpush1.bf16.xpose.msra.mxu0 %v560
    %564 = vmatprep.subr.bf16.mxu0 0
    %565 = vmatpush1.bf16.xpose.msra.mxu0 0
    %566 = vmatprep.subr.bf16.mxu0 0
    %567 = vmatpush1.bf16.xpose.msra.mxu0 0
    %568 = vmatprep.subr.bf16.mxu0 0
    %569 = vmatpush1.bf16.xpose.msra.mxu0 0
    %570 = vmatprep.subr.bf16.mxu0 0
    %571 = vmatpush1.bf16.xpose.msra.mxu0 0
    %572 = vmatprep.subr.bf16.mxu0 0
    %573 = vmatpush1.bf16.xpose.msra.mxu0 0
    %574 = vmatprep.subr.bf16.mxu0 0
    %575 = vmatpush1.bf16.xpose.msra.mxu0 0
    %576 = vmatprep.subr.bf16.mxu0 0
    %577 = vmatpush1.bf16.xpose.msra.mxu0 0
    %578 = vmatprep.subr.bf16.mxu0 0
    %579 = vmatpush1.bf16.xpose.msra.mxu0 0
    %580 = vmatprep.subr.bf16.mxu0 0
    %581 = vmatpush1.bf16.xpose.msra.mxu0 0
    %582 = vmatprep.subr.bf16.mxu0 0
    %583 = vmatpush1.bf16.xpose.msra.mxu0 0
    %584 = vmatprep.subr.bf16.mxu0 0
    %585 = vmatpush1.bf16.xpose.msra.mxu0 0
    %586 = vmatprep.subr.bf16.mxu0 0
    %587 = vmatpush1.bf16.xpose.msra.mxu0 0
    %588 = vmatprep.subr.bf16.mxu0 0
    %589 = vmatpush1.bf16.xpose.msra.mxu0 0
    %590 = vmatprep.subr.bf16.mxu0 0
    %591 = vmatpush1.bf16.xpose.msra.mxu0 0
    %592 = vmatprep.subr.bf16.mxu0 0
    %593 = vmatpush1.bf16.xpose.msra.mxu0 0
    %594 = vmatprep.mubr.bf16.mxu0 0
    %595 = vmatmul.mubr.bf16.gmra.mrb[0].mxu0 %v557
    %v596 = vpop.f32.mrb[0].mxu0
    %v597 = vadd.f32 %v442, %v596
    %v598 = vpop.f32.mrb[0].mxu0
    %v599 = vpop.f32.mrb[0].mxu0
    %v600 = vpop.f32.mrb[0].mxu0
    %601 = vdwg.mxu0
    %v602 = vsel %vm491, %v597, -inf
    %603 = vmax.xlane.f32.xlu0 %v602
    %v604 = vpop.xlane.xlu0 %603
    %v605 = vsub.f32 %v597, %v604
    %v606 = vmul.f32 %v605, 1.442695
    %v607 = vpow.pop %v606
    %v608 = vsel %vm491, %v607, 0.0
    %609 = vadd.xlane.f32.xlu0 %v608
    %v610 = vpop.xlane.xlu0 %609
    %v611 = vrcp.pop %v610
    %v612 = vmul.f32 %v607, %v611
    %v613 = vpack.c.bf16 %v612, %v612
    %614 = vrot.lane.b32.xlu0 %v434, 88
    %v615 = vpop.permute.xlu0 %614
    %v618 = vsel %vm491, %v613, 0
    %620 = vmatprep.subr.bf16.mxu0 0
    %621 = vmatpush1.bf16.msra.mxu0 %v615
    %622 = vmatprep.subr.bf16.mxu0 0
    %623 = vmatpush1.bf16.msra.mxu0 0
    %624 = vmatprep.subr.bf16.mxu0 0
    %625 = vmatpush1.bf16.msra.mxu0 0
    %626 = vmatprep.subr.bf16.mxu0 0
    %627 = vmatpush1.bf16.msra.mxu0 0
    %628 = vmatprep.subr.bf16.mxu0 0
    %629 = vmatpush1.bf16.msra.mxu0 0
    %630 = vmatprep.subr.bf16.mxu0 0
    %631 = vmatpush1.bf16.msra.mxu0 0
    %632 = vmatprep.subr.bf16.mxu0 0
    %633 = vmatpush1.bf16.msra.mxu0 0
    %634 = vmatprep.subr.bf16.mxu0 0
    %635 = vmatpush1.bf16.msra.mxu0 0
    %636 = vmatprep.subr.bf16.mxu0 0
    %637 = vmatpush1.bf16.msra.mxu0 0
    %638 = vmatprep.subr.bf16.mxu0 0
    %639 = vmatpush1.bf16.msra.mxu0 0
    %640 = vmatprep.subr.bf16.mxu0 0
    %641 = vmatpush1.bf16.msra.mxu0 0
    %642 = vmatprep.subr.bf16.mxu0 0
    %643 = vmatpush1.bf16.msra.mxu0 0
    %644 = vmatprep.subr.bf16.mxu0 0
    %645 = vmatpush1.bf16.msra.mxu0 0
    %646 = vmatprep.subr.bf16.mxu0 0
    %647 = vmatpush1.bf16.msra.mxu0 0
    %648 = vmatprep.subr.bf16.mxu0 0
    %649 = vmatpush1.bf16.msra.mxu0 0
    %650 = vmatprep.subr.bf16.mxu0 0
    %651 = vmatpush1.bf16.msra.mxu0 0
    %652 = vmatprep.mubr.bf16.mxu0 0
    %653 = vmatmul.mubr.bf16.gmra.mrb[0].mxu0 %v618
    %v654 = vpop.f32.mrb[0].mxu0
    %v655 = vadd.f32 0.0, %v654
    %v656 = vpop.f32.mrb[0].mxu0
    %v657 = vpop.f32.mrb[0].mxu0
    %v658 = vpop.f32.mrb[0].mxu0
    %659 = vdwg.mxu0
    %660 = vrot.lane.b32.xlu0 %v433, 112
    %v661 = vpop.permute.xlu0 %660
    %662 = vrot.lane.b32.xlu0 %v434, 112
    %v663 = vpop.permute.xlu0 %662
    %v665 = vsel %vm444, %v661, 0
    %v668 = vsel %vm444, %v663, 0
    %670 = vmatprep.subr.bf16.mxu0 0
    %671 = vmatpush1.bf16.xpose.msra.mxu0 %v668
    %672 = vmatprep.subr.bf16.mxu0 0
    %673 = vmatpush1.bf16.xpose.msra.mxu0 0
    %674 = vmatprep.subr.bf16.mxu0 0
    %675 = vmatpush1.bf16.xpose.msra.mxu0 0
    %676 = vmatprep.subr.bf16.mxu0 0
    %677 = vmatpush1.bf16.xpose.msra.mxu0 0
    %678 = vmatprep.subr.bf16.mxu0 0
    %679 = vmatpush1.bf16.xpose.msra.mxu0 0
    %680 = vmatprep.subr.bf16.mxu0 0
    %681 = vmatpush1.bf16.xpose.msra.mxu0 0
    %682 = vmatprep.subr.bf16.mxu0 0
    %683 = vmatpush1.bf16.xpose.msra.mxu0 0
    %684 = vmatprep.subr.bf16.mxu0 0
    %685 = vmatpush1.bf16.xpose.msra.mxu0 0
    %686 = vmatprep.subr.bf16.mxu0 0
    %687 = vmatpush1.bf16.xpose.msra.mxu0 0
    %688 = vmatprep.subr.bf16.mxu0 0
    %689 = vmatpush1.bf16.xpose.msra.mxu0 0
    %690 = vmatprep.subr.bf16.mxu0 0
    %691 = vmatpush1.bf16.xpose.msra.mxu0 0
    %692 = vmatprep.subr.bf16.mxu0 0
    %693 = vmatpush1.bf16.xpose.msra.mxu0 0
    %694 = vmatprep.subr.bf16.mxu0 0
    %695 = vmatpush1.bf16.xpose.msra.mxu0 0
    %696 = vmatprep.subr.bf16.mxu0 0
    %697 = vmatpush1.bf16.xpose.msra.mxu0 0
    %698 = vmatprep.subr.bf16.mxu0 0
    %699 = vmatpush1.bf16.xpose.msra.mxu0 0
    %700 = vmatprep.subr.bf16.mxu0 0
    %701 = vmatpush1.bf16.xpose.msra.mxu0 0
    %702 = vmatprep.mubr.bf16.mxu0 0
    %703 = vmatmul.mubr.bf16.gmra.mrb[0].mxu0 %v665
    %v704 = vpop.f32.mrb[0].mxu0
    %v705 = vadd.f32 %v442, %v704
    %v706 = vpop.f32.mrb[0].mxu0
    %v707 = vpop.f32.mrb[0].mxu0
    %v708 = vpop.f32.mrb[0].mxu0
    %709 = vdwg.mxu0
    %v710 = vsel %vm491, %v705, -inf
    %711 = vmax.xlane.f32.xlu0 %v710
    %v712 = vpop.xlane.xlu0 %711
    %v713 = vsub.f32 %v705, %v712
    %v714 = vmul.f32 %v713, 1.442695
    %v715 = vpow.pop %v714
    %v716 = vsel %vm491, %v715, 0.0
    %717 = vadd.xlane.f32.xlu0 %v716
    %v718 = vpop.xlane.xlu0 %717
    %v719 = vrcp.pop %v718
    %v720 = vmul.f32 %v715, %v719
    %v721 = vpack.c.bf16 %v720, %v720
    %722 = vrot.lane.b32.xlu0 %v434, 80
    %v723 = vpop.permute.xlu0 %722
    %v726 = vsel %vm491, %v721, 0
    %728 = vmatprep.subr.bf16.mxu0 0
    %729 = vmatpush1.bf16.msra.mxu0 %v723
    %730 = vmatprep.subr.bf16.mxu0 0
    %731 = vmatpush1.bf16.msra.mxu0 0
    %732 = vmatprep.subr.bf16.mxu0 0
    %733 = vmatpush1.bf16.msra.mxu0 0
    %734 = vmatprep.subr.bf16.mxu0 0
    %735 = vmatpush1.bf16.msra.mxu0 0
    %736 = vmatprep.subr.bf16.mxu0 0
    %737 = vmatpush1.bf16.msra.mxu0 0
    %738 = vmatprep.subr.bf16.mxu0 0
    %739 = vmatpush1.bf16.msra.mxu0 0
    %740 = vmatprep.subr.bf16.mxu0 0
    %741 = vmatpush1.bf16.msra.mxu0 0
    %742 = vmatprep.subr.bf16.mxu0 0
    %743 = vmatpush1.bf16.msra.mxu0 0
    %744 = vmatprep.subr.bf16.mxu0 0
    %745 = vmatpush1.bf16.msra.mxu0 0
    %746 = vmatprep.subr.bf16.mxu0 0
    %747 = vmatpush1.bf16.msra.mxu0 0
    %748 = vmatprep.subr.bf16.mxu0 0
    %749 = vmatpush1.bf16.msra.mxu0 0
    %750 = vmatprep.subr.bf16.mxu0 0
    %751 = vmatpush1.bf16.msra.mxu0 0
    %752 = vmatprep.subr.bf16.mxu0 0
    %753 = vmatpush1.bf16.msra.mxu0 0
    %754 = vmatprep.subr.bf16.mxu0 0
    %755 = vmatpush1.bf16.msra.mxu0 0
    %756 = vmatprep.subr.bf16.mxu0 0
    %757 = vmatpush1.bf16.msra.mxu0 0
    %758 = vmatprep.subr.bf16.mxu0 0
    %759 = vmatpush1.bf16.msra.mxu0 0
    %760 = vmatprep.mubr.bf16.mxu0 0
    %761 = vmatmul.mubr.bf16.gmra.mrb[0].mxu0 %v726
    %v762 = vpop.f32.mrb[0].mxu0
    %v763 = vadd.f32 0.0, %v762
    %v764 = vpop.f32.mrb[0].mxu0
    %v765 = vpop.f32.mrb[0].mxu0
    %v766 = vpop.f32.mrb[0].mxu0
    %767 = vdwg.mxu0
    %768 = vrot.lane.b32.xlu0 %v433, 104
    %v769 = vpop.permute.xlu0 %768
    %770 = vrot.lane.b32.xlu0 %v434, 104
    %v771 = vpop.permute.xlu0 %770
    %v773 = vsel %vm444, %v769, 0
    %v776 = vsel %vm444, %v771, 0
    %778 = vmatprep.subr.bf16.mxu0 0
    %779 = vmatpush1.bf16.xpose.msra.mxu0 %v776
    %780 = vmatprep.subr.bf16.mxu0 0
    %781 = vmatpush1.bf16.xpose.msra.mxu0 0
    %782 = vmatprep.subr.bf16.mxu0 0
    %783 = vmatpush1.bf16.xpose.msra.mxu0 0
    %784 = vmatprep.subr.bf16.mxu0 0
    %785 = vmatpush1.bf16.xpose.msra.mxu0 0
    %786 = vmatprep.subr.bf16.mxu0 0
    %787 = vmatpush1.bf16.xpose.msra.mxu0 0
    %788 = vmatprep.subr.bf16.mxu0 0
    %789 = vmatpush1.bf16.xpose.msra.mxu0 0
    %790 = vmatprep.subr.bf16.mxu0 0
    %791 = vmatpush1.bf16.xpose.msra.mxu0 0
    %792 = vmatprep.subr.bf16.mxu0 0
    %793 = vmatpush1.bf16.xpose.msra.mxu0 0
    %794 = vmatprep.subr.bf16.mxu0 0
    %795 = vmatpush1.bf16.xpose.msra.mxu0 0
    %796 = vmatprep.subr.bf16.mxu0 0
    %797 = vmatpush1.bf16.xpose.msra.mxu0 0
    %798 = vmatprep.subr.bf16.mxu0 0
    %799 = vmatpush1.bf16.xpose.msra.mxu0 0
    %800 = vmatprep.subr.bf16.mxu0 0
    %801 = vmatpush1.bf16.xpose.msra.mxu0 0
    %802 = vmatprep.subr.bf16.mxu0 0
    %803 = vmatpush1.bf16.xpose.msra.mxu0 0
    %804 = vmatprep.subr.bf16.mxu0 0
    %805 = vmatpush1.bf16.xpose.msra.mxu0 0
    %806 = vmatprep.subr.bf16.mxu0 0
    %807 = vmatpush1.bf16.xpose.msra.mxu0 0
    %808 = vmatprep.subr.bf16.mxu0 0
    %809 = vmatpush1.bf16.xpose.msra.mxu0 0
    %810 = vmatprep.mubr.bf16.mxu0 0
    %811 = vmatmul.mubr.bf16.gmra.mrb[0].mxu0 %v773
    %v812 = vpop.f32.mrb[0].mxu0
    %v813 = vadd.f32 %v442, %v812
    %v814 = vpop.f32.mrb[0].mxu0
    %v815 = vpop.f32.mrb[0].mxu0
    %v816 = vpop.f32.mrb[0].mxu0
    %817 = vdwg.mxu0
    %v818 = vsel %vm491, %v813, -inf
    %819 = vmax.xlane.f32.xlu0 %v818
    %v820 = vpop.xlane.xlu0 %819
    %v821 = vsub.f32 %v813, %v820
    %v822 = vmul.f32 %v821, 1.442695
    %v823 = vpow.pop %v822
    %v824 = vsel %vm491, %v823, 0.0
    %825 = vadd.xlane.f32.xlu0 %v824
    %v826 = vpop.xlane.xlu0 %825
    %v827 = vrcp.pop %v826
    %v828 = vmul.f32 %v823, %v827
    %v829 = vpack.c.bf16 %v828, %v828
    %830 = vrot.lane.b32.xlu0 %v434, 72
    %v831 = vpop.permute.xlu0 %830
    %v834 = vsel %vm491, %v829, 0
    %836 = vmatprep.subr.bf16.mxu0 0
    %837 = vmatpush1.bf16.msra.mxu0 %v831
    %838 = vmatprep.subr.bf16.mxu0 0
    %839 = vmatpush1.bf16.msra.mxu0 0
    %840 = vmatprep.subr.bf16.mxu0 0
    %841 = vmatpush1.bf16.msra.mxu0 0
    %842 = vmatprep.subr.bf16.mxu0 0
    %843 = vmatpush1.bf16.msra.mxu0 0
    %844 = vmatprep.subr.bf16.mxu0 0
    %845 = vmatpush1.bf16.msra.mxu0 0
    %846 = vmatprep.subr.bf16.mxu0 0
    %847 = vmatpush1.bf16.msra.mxu0 0
    %848 = vmatprep.subr.bf16.mxu0 0
    %849 = vmatpush1.bf16.msra.mxu0 0
    %850 = vmatprep.subr.bf16.mxu0 0
    %851 = vmatpush1.bf16.msra.mxu0 0
    %852 = vmatprep.subr.bf16.mxu0 0
    %853 = vmatpush1.bf16.msra.mxu0 0
    %854 = vmatprep.subr.bf16.mxu0 0
    %855 = vmatpush1.bf16.msra.mxu0 0
    %856 = vmatprep.subr.bf16.mxu0 0
    %857 = vmatpush1.bf16.msra.mxu0 0
    %858 = vmatprep.subr.bf16.mxu0 0
    %859 = vmatpush1.bf16.msra.mxu0 0
    %860 = vmatprep.subr.bf16.mxu0 0
    %861 = vmatpush1.bf16.msra.mxu0 0
    %862 = vmatprep.subr.bf16.mxu0 0
    %863 = vmatpush1.bf16.msra.mxu0 0
    %864 = vmatprep.subr.bf16.mxu0 0
    %865 = vmatpush1.bf16.msra.mxu0 0
    %866 = vmatprep.subr.bf16.mxu0 0
    %867 = vmatpush1.bf16.msra.mxu0 0
    %868 = vmatprep.mubr.bf16.mxu0 0
    %869 = vmatmul.mubr.bf16.gmra.mrb[0].mxu0 %v834
    %v870 = vpop.f32.mrb[0].mxu0
    %v871 = vadd.f32 0.0, %v870
    %v872 = vpop.f32.mrb[0].mxu0
    %v873 = vpop.f32.mrb[0].mxu0
    %v874 = vpop.f32.mrb[0].mxu0
    %875 = vdwg.mxu0
    %877 = vrot.lane.b32.xlu0 %v655, 8
    %v878 = vpop.permute.xlu0 %877
    %881 = vrot.lane.b32.xlu0 %v763, 16
    %v882 = vpop.permute.xlu0 %881
    %885 = vrot.lane.b32.xlu0 %v871, 24
    %v886 = vpop.permute.xlu0 %885
    %v888 = vsel %vm444, %v546, %v878
    %v889 = vsel %vm491, %v888, %v882
    %vm890 = vcmask 195584
    %v891 = vsel %vm890, %v889, %v886
    %v893 = vlaneseq
    %v894 = vshrl.u32 %v893, 7
    %v895 = vsub.s32 0, %v894
    %v896 = vrot.slane %v437, %v895
    %v898 = vrot.slane %v433, 4
    %v900 = vsel %vm444, %v898, 0
    %v903 = vsel %vm444, %v435, 0
    %905 = vmatprep.subr.bf16.mxu0 0
    %906 = vmatpush1.bf16.xpose.msra.mxu0 %v903
    %907 = vmatprep.subr.bf16.mxu0 0
    %908 = vmatpush1.bf16.xpose.msra.mxu0 0
    %909 = vmatprep.subr.bf16.mxu0 0
    %910 = vmatpush1.bf16.xpose.msra.mxu0 0
    %911 = vmatprep.subr.bf16.mxu0 0
    %912 = vmatpush1.bf16.xpose.msra.mxu0 0
    %913 = vmatprep.subr.bf16.mxu0 0
    %914 = vmatpush1.bf16.xpose.msra.mxu0 0
    %915 = vmatprep.subr.bf16.mxu0 0
    %916 = vmatpush1.bf16.xpose.msra.mxu0 0
    %917 = vmatprep.subr.bf16.mxu0 0
    %918 = vmatpush1.bf16.xpose.msra.mxu0 0
    %919 = vmatprep.subr.bf16.mxu0 0
    %920 = vmatpush1.bf16.xpose.msra.mxu0 0
    %921 = vmatprep.subr.bf16.mxu0 0
    %922 = vmatpush1.bf16.xpose.msra.mxu0 0
    %923 = vmatprep.subr.bf16.mxu0 0
    %924 = vmatpush1.bf16.xpose.msra.mxu0 0
    %925 = vmatprep.subr.bf16.mxu0 0
    %926 = vmatpush1.bf16.xpose.msra.mxu0 0
    %927 = vmatprep.subr.bf16.mxu0 0
    %928 = vmatpush1.bf16.xpose.msra.mxu0 0
    %929 = vmatprep.subr.bf16.mxu0 0
    %930 = vmatpush1.bf16.xpose.msra.mxu0 0
    %931 = vmatprep.subr.bf16.mxu0 0
    %932 = vmatpush1.bf16.xpose.msra.mxu0 0
    %933 = vmatprep.subr.bf16.mxu0 0
    %934 = vmatpush1.bf16.xpose.msra.mxu0 0
    %935 = vmatprep.subr.bf16.mxu0 0
    %936 = vmatpush1.bf16.xpose.msra.mxu0 0
    %937 = vmatprep.mubr.bf16.mxu0 0
    %938 = vmatmul.mubr.bf16.gmra.mrb[0].mxu0 %v900
    %v939 = vpop.f32.mrb[0].mxu0
    %v940 = vadd.f32 %v896, %v939
    %v941 = vpop.f32.mrb[0].mxu0
    %v942 = vpop.f32.mrb[0].mxu0
    %v943 = vpop.f32.mrb[0].mxu0
    %944 = vdwg.mxu0
    %v945 = vsel %vm491, %v940, -inf
    %946 = vmax.xlane.f32.xlu0 %v945
    %v947 = vpop.xlane.xlu0 %946
    %v948 = vsub.f32 %v940, %v947
    %v949 = vmul.f32 %v948, 1.442695
    %v950 = vpow.pop %v949
    %v951 = vsel %vm491, %v950, 0.0
    %952 = vadd.xlane.f32.xlu0 %v951
    %v953 = vpop.xlane.xlu0 %952
    %v954 = vrcp.pop %v953
    %v955 = vmul.f32 %v950, %v954
    %v956 = vpack.c.bf16 %v955, %v955
    %958 = vrot.lane.b32.xlu0 %v435, 96
    %v959 = vpop.permute.xlu0 %958
    %v962 = vsel %vm491, %v956, 0
    %964 = vmatprep.subr.bf16.mxu0 0
    %965 = vmatpush1.bf16.msra.mxu0 %v959
    %966 = vmatprep.subr.bf16.mxu0 0
    %967 = vmatpush1.bf16.msra.mxu0 0
    %968 = vmatprep.subr.bf16.mxu0 0
    %969 = vmatpush1.bf16.msra.mxu0 0
    %970 = vmatprep.subr.bf16.mxu0 0
    %971 = vmatpush1.bf16.msra.mxu0 0
    %972 = vmatprep.subr.bf16.mxu0 0
    %973 = vmatpush1.bf16.msra.mxu0 0
    %974 = vmatprep.subr.bf16.mxu0 0
    %975 = vmatpush1.bf16.msra.mxu0 0
    %976 = vmatprep.subr.bf16.mxu0 0
    %977 = vmatpush1.bf16.msra.mxu0 0
    %978 = vmatprep.subr.bf16.mxu0 0
    %979 = vmatpush1.bf16.msra.mxu0 0
    %980 = vmatprep.subr.bf16.mxu0 0
    %981 = vmatpush1.bf16.msra.mxu0 0
    %982 = vmatprep.subr.bf16.mxu0 0
    %983 = vmatpush1.bf16.msra.mxu0 0
    %984 = vmatprep.subr.bf16.mxu0 0
    %985 = vmatpush1.bf16.msra.mxu0 0
    %986 = vmatprep.subr.bf16.mxu0 0
    %987 = vmatpush1.bf16.msra.mxu0 0
    %988 = vmatprep.subr.bf16.mxu0 0
    %989 = vmatpush1.bf16.msra.mxu0 0
    %990 = vmatprep.subr.bf16.mxu0 0
    %991 = vmatpush1.bf16.msra.mxu0 0
    %992 = vmatprep.subr.bf16.mxu0 0
    %993 = vmatpush1.bf16.msra.mxu0 0
    %994 = vmatprep.subr.bf16.mxu0 0
    %995 = vmatpush1.bf16.msra.mxu0 0
    %996 = vmatprep.mubr.bf16.mxu0 0
    %997 = vmatmul.mubr.bf16.gmra.mrb[0].mxu0 %v962
    %v998 = vpop.f32.mrb[0].mxu0
    %v999 = vadd.f32 0.0, %v998
    %v1000 = vpop.f32.mrb[0].mxu0
    %v1001 = vpop.f32.mrb[0].mxu0
    %v1002 = vpop.f32.mrb[0].mxu0
    %1003 = vdwg.mxu0
    %1004 = vrot.lane.b32.xlu0 %v898, 120
    %v1005 = vpop.permute.xlu0 %1004
    %1006 = vrot.lane.b32.xlu0 %v435, 120
    %v1007 = vpop.permute.xlu0 %1006
    %v1009 = vsel %vm444, %v1005, 0
    %v1012 = vsel %vm444, %v1007, 0
    %1014 = vmatprep.subr.bf16.mxu0 0
    %1015 = vmatpush1.bf16.xpose.msra.mxu0 %v1012
    %1016 = vmatprep.subr.bf16.mxu0 0
    %1017 = vmatpush1.bf16.xpose.msra.mxu0 0
    %1018 = vmatprep.subr.bf16.mxu0 0
    %1019 = vmatpush1.bf16.xpose.msra.mxu0 0
    %1020 = vmatprep.subr.bf16.mxu0 0
    %1021 = vmatpush1.bf16.xpose.msra.mxu0 0
    %1022 = vmatprep.subr.bf16.mxu0 0
    %1023 = vmatpush1.bf16.xpose.msra.mxu0 0
    %1024 = vmatprep.subr.bf16.mxu0 0
    %1025 = vmatpush1.bf16.xpose.msra.mxu0 0
    %1026 = vmatprep.subr.bf16.mxu0 0
    %1027 = vmatpush1.bf16.xpose.msra.mxu0 0
    %1028 = vmatprep.subr.bf16.mxu0 0
    %1029 = vmatpush1.bf16.xpose.msra.mxu0 0
    %1030 = vmatprep.subr.bf16.mxu0 0
    %1031 = vmatpush1.bf16.xpose.msra.mxu0 0
    %1032 = vmatprep.subr.bf16.mxu0 0
    %1033 = vmatpush1.bf16.xpose.msra.mxu0 0
    %1034 = vmatprep.subr.bf16.mxu0 0
    %1035 = vmatpush1.bf16.xpose.msra.mxu0 0
    %1036 = vmatprep.subr.bf16.mxu0 0
    %1037 = vmatpush1.bf16.xpose.msra.mxu0 0
    %1038 = vmatprep.subr.bf16.mxu0 0
    %1039 = vmatpush1.bf16.xpose.msra.mxu0 0
    %1040 = vmatprep.subr.bf16.mxu0 0
    %1041 = vmatpush1.bf16.xpose.msra.mxu0 0
    %1042 = vmatprep.subr.bf16.mxu0 0
    %1043 = vmatpush1.bf16.xpose.msra.mxu0 0
    %1044 = vmatprep.subr.bf16.mxu0 0
    %1045 = vmatpush1.bf16.xpose.msra.mxu0 0
    %1046 = vmatprep.mubr.bf16.mxu0 0
    %1047 = vmatmul.mubr.bf16.gmra.mrb[0].mxu0 %v1009
    %v1048 = vpop.f32.mrb[0].mxu0
    %v1049 = vadd.f32 %v896, %v1048
    %v1050 = vpop.f32.mrb[0].mxu0
    %v1051 = vpop.f32.mrb[0].mxu0
    %v1052 = vpop.f32.mrb[0].mxu0
    %1053 = vdwg.mxu0
    %v1054 = vsel %vm491, %v1049, -inf
    %1055 = vmax.xlane.f32.xlu0 %v1054
    %v1056 = vpop.xlane.xlu0 %1055
    %v1057 = vsub.f32 %v1049, %v1056
    %v1058 = vmul.f32 %v1057, 1.442695
    %v1059 = vpow.pop %v1058
    %v1060 = vsel %vm491, %v1059, 0.0
    %1061 = vadd.xlane.f32.xlu0 %v1060
    %v1062 = vpop.xlane.xlu0 %1061
    %v1063 = vrcp.pop %v1062
    %v1064 = vmul.f32 %v1059, %v1063
    %v1065 = vpack.c.bf16 %v1064, %v1064
    %1066 = vrot.lane.b32.xlu0 %v435, 88
    %v1067 = vpop.permute.xlu0 %1066
    %v1070 = vsel %vm491, %v1065, 0
    %1072 = vmatprep.subr.bf16.mxu0 0
    %1073 = vmatpush1.bf16.msra.mxu0 %v1067
    %1074 = vmatprep.subr.bf16.mxu0 0
    %1075 = vmatpush1.bf16.msra.mxu0 0
    %1076 = vmatprep.subr.bf16.mxu0 0
    %1077 = vmatpush1.bf16.msra.mxu0 0
    %1078 = vmatprep.subr.bf16.mxu0 0
    %1079 = vmatpush1.bf16.msra.mxu0 0
    %1080 = vmatprep.subr.bf16.mxu0 0
    %1081 = vmatpush1.bf16.msra.mxu0 0
    %1082 = vmatprep.subr.bf16.mxu0 0
    %1083 = vmatpush1.bf16.msra.mxu0 0
    %1084 = vmatprep.subr.bf16.mxu0 0
    %1085 = vmatpush1.bf16.msra.mxu0 0
    %1086 = vmatprep.subr.bf16.mxu0 0
    %1087 = vmatpush1.bf16.msra.mxu0 0
    %1088 = vmatprep.subr.bf16.mxu0 0
    %1089 = vmatpush1.bf16.msra.mxu0 0
    %1090 = vmatprep.subr.bf16.mxu0 0
    %1091 = vmatpush1.bf16.msra.mxu0 0
    %1092 = vmatprep.subr.bf16.mxu0 0
    %1093 = vmatpush1.bf16.msra.mxu0 0
    %1094 = vmatprep.subr.bf16.mxu0 0
    %1095 = vmatpush1.bf16.msra.mxu0 0
    %1096 = vmatprep.subr.bf16.mxu0 0
    %1097 = vmatpush1.bf16.msra.mxu0 0
    %1098 = vmatprep.subr.bf16.mxu0 0
    %1099 = vmatpush1.bf16.msra.mxu0 0
    %1100 = vmatprep.subr.bf16.mxu0 0
    %1101 = vmatpush1.bf16.msra.mxu0 0
    %1102 = vmatprep.subr.bf16.mxu0 0
    %1103 = vmatpush1.bf16.msra.mxu0 0
    %1104 = vmatprep.mubr.bf16.mxu0 0
    %1105 = vmatmul.mubr.bf16.gmra.mrb[0].mxu0 %v1070
    %v1106 = vpop.f32.mrb[0].mxu0
    %v1107 = vadd.f32 0.0, %v1106
    %v1108 = vpop.f32.mrb[0].mxu0
    %v1109 = vpop.f32.mrb[0].mxu0
    %v1110 = vpop.f32.mrb[0].mxu0
    %1111 = vdwg.mxu0
    %1112 = vrot.lane.b32.xlu0 %v898, 112
    %v1113 = vpop.permute.xlu0 %1112
    %1114 = vrot.lane.b32.xlu0 %v435, 112
    %v1115 = vpop.permute.xlu0 %1114
    %v1117 = vsel %vm444, %v1113, 0
    %v1120 = vsel %vm444, %v1115, 0
    %1122 = vmatprep.subr.bf16.mxu0 0
    %1123 = vmatpush1.bf16.xpose.msra.mxu0 %v1120
    %1124 = vmatprep.subr.bf16.mxu0 0
    %1125 = vmatpush1.bf16.xpose.msra.mxu0 0
    %1126 = vmatprep.subr.bf16.mxu0 0
    %1127 = vmatpush1.bf16.xpose.msra.mxu0 0
    %1128 = vmatprep.subr.bf16.mxu0 0
    %1129 = vmatpush1.bf16.xpose.msra.mxu0 0
    %1130 = vmatprep.subr.bf16.mxu0 0
    %1131 = vmatpush1.bf16.xpose.msra.mxu0 0
    %1132 = vmatprep.subr.bf16.mxu0 0
    %1133 = vmatpush1.bf16.xpose.msra.mxu0 0
    %1134 = vmatprep.subr.bf16.mxu0 0
    %1135 = vmatpush1.bf16.xpose.msra.mxu0 0
    %1136 = vmatprep.subr.bf16.mxu0 0
    %1137 = vmatpush1.bf16.xpose.msra.mxu0 0
    %1138 = vmatprep.subr.bf16.mxu0 0
    %1139 = vmatpush1.bf16.xpose.msra.mxu0 0
    %1140 = vmatprep.subr.bf16.mxu0 0
    %1141 = vmatpush1.bf16.xpose.msra.mxu0 0
    %1142 = vmatprep.subr.bf16.mxu0 0
    %1143 = vmatpush1.bf16.xpose.msra.mxu0 0
    %1144 = vmatprep.subr.bf16.mxu0 0
    %1145 = vmatpush1.bf16.xpose.msra.mxu0 0
    %1146 = vmatprep.subr.bf16.mxu0 0
    %1147 = vmatpush1.bf16.xpose.msra.mxu0 0
    %1148 = vmatprep.subr.bf16.mxu0 0
    %1149 = vmatpush1.bf16.xpose.msra.mxu0 0
    %1150 = vmatprep.subr.bf16.mxu0 0
    %1151 = vmatpush1.bf16.xpose.msra.mxu0 0
    %1152 = vmatprep.subr.bf16.mxu0 0
    %1153 = vmatpush1.bf16.xpose.msra.mxu0 0
    %1154 = vmatprep.mubr.bf16.mxu0 0
    %1155 = vmatmul.mubr.bf16.gmra.mrb[0].mxu0 %v1117
    %v1156 = vpop.f32.mrb[0].mxu0
    %v1157 = vadd.f32 %v896, %v1156
    %v1158 = vpop.f32.mrb[0].mxu0
    %v1159 = vpop.f32.mrb[0].mxu0
    %v1160 = vpop.f32.mrb[0].mxu0
    %1161 = vdwg.mxu0
    %v1162 = vsel %vm491, %v1157, -inf
    %1163 = vmax.xlane.f32.xlu0 %v1162
    %v1164 = vpop.xlane.xlu0 %1163
    %v1165 = vsub.f32 %v1157, %v1164
    %v1166 = vmul.f32 %v1165, 1.442695
    %v1167 = vpow.pop %v1166
    %v1168 = vsel %vm491, %v1167, 0.0
    %1169 = vadd.xlane.f32.xlu0 %v1168
    %v1170 = vpop.xlane.xlu0 %1169
    %v1171 = vrcp.pop %v1170
    %v1172 = vmul.f32 %v1167, %v1171
    %v1173 = vpack.c.bf16 %v1172, %v1172
    %1174 = vrot.lane.b32.xlu0 %v435, 80
    %v1175 = vpop.permute.xlu0 %1174
    %v1178 = vsel %vm491, %v1173, 0
    %1180 = vmatprep.subr.bf16.mxu0 0
    %1181 = vmatpush1.bf16.msra.mxu0 %v1175
    %1182 = vmatprep.subr.bf16.mxu0 0
    %1183 = vmatpush1.bf16.msra.mxu0 0
    %1184 = vmatprep.subr.bf16.mxu0 0
    %1185 = vmatpush1.bf16.msra.mxu0 0
    %1186 = vmatprep.subr.bf16.mxu0 0
    %1187 = vmatpush1.bf16.msra.mxu0 0
    %1188 = vmatprep.subr.bf16.mxu0 0
    %1189 = vmatpush1.bf16.msra.mxu0 0
    %1190 = vmatprep.subr.bf16.mxu0 0
    %1191 = vmatpush1.bf16.msra.mxu0 0
    %1192 = vmatprep.subr.bf16.mxu0 0
    %1193 = vmatpush1.bf16.msra.mxu0 0
    %1194 = vmatprep.subr.bf16.mxu0 0
    %1195 = vmatpush1.bf16.msra.mxu0 0
    %1196 = vmatprep.subr.bf16.mxu0 0
    %1197 = vmatpush1.bf16.msra.mxu0 0
    %1198 = vmatprep.subr.bf16.mxu0 0
    %1199 = vmatpush1.bf16.msra.mxu0 0
    %1200 = vmatprep.subr.bf16.mxu0 0
    %1201 = vmatpush1.bf16.msra.mxu0 0
    %1202 = vmatprep.subr.bf16.mxu0 0
    %1203 = vmatpush1.bf16.msra.mxu0 0
    %1204 = vmatprep.subr.bf16.mxu0 0
    %1205 = vmatpush1.bf16.msra.mxu0 0
    %1206 = vmatprep.subr.bf16.mxu0 0
    %1207 = vmatpush1.bf16.msra.mxu0 0
    %1208 = vmatprep.subr.bf16.mxu0 0
    %1209 = vmatpush1.bf16.msra.mxu0 0
    %1210 = vmatprep.subr.bf16.mxu0 0
    %1211 = vmatpush1.bf16.msra.mxu0 0
    %1212 = vmatprep.mubr.bf16.mxu0 0
    %1213 = vmatmul.mubr.bf16.gmra.mrb[0].mxu0 %v1178
    %v1214 = vpop.f32.mrb[0].mxu0
    %v1215 = vadd.f32 0.0, %v1214
    %v1216 = vpop.f32.mrb[0].mxu0
    %v1217 = vpop.f32.mrb[0].mxu0
    %v1218 = vpop.f32.mrb[0].mxu0
    %1219 = vdwg.mxu0
    %1220 = vrot.lane.b32.xlu0 %v898, 104
    %v1221 = vpop.permute.xlu0 %1220
    %1222 = vrot.lane.b32.xlu0 %v435, 104
    %v1223 = vpop.permute.xlu0 %1222
    %v1225 = vsel %vm444, %v1221, 0
    %v1228 = vsel %vm444, %v1223, 0
    %1230 = vmatprep.subr.bf16.mxu0 0
    %1231 = vmatpush1.bf16.xpose.msra.mxu0 %v1228
    %1232 = vmatprep.subr.bf16.mxu0 0
    %1233 = vmatpush1.bf16.xpose.msra.mxu0 0
    %1234 = vmatprep.subr.bf16.mxu0 0
    %1235 = vmatpush1.bf16.xpose.msra.mxu0 0
    %1236 = vmatprep.subr.bf16.mxu0 0
    %1237 = vmatpush1.bf16.xpose.msra.mxu0 0
    %1238 = vmatprep.subr.bf16.mxu0 0
    %1239 = vmatpush1.bf16.xpose.msra.mxu0 0
    %1240 = vmatprep.subr.bf16.mxu0 0
    %1241 = vmatpush1.bf16.xpose.msra.mxu0 0
    %1242 = vmatprep.subr.bf16.mxu0 0
    %1243 = vmatpush1.bf16.xpose.msra.mxu0 0
    %1244 = vmatprep.subr.bf16.mxu0 0
    %1245 = vmatpush1.bf16.xpose.msra.mxu0 0
    %1246 = vmatprep.subr.bf16.mxu0 0
    %1247 = vmatpush1.bf16.xpose.msra.mxu0 0
    %1248 = vmatprep.subr.bf16.mxu0 0
    %1249 = vmatpush1.bf16.xpose.msra.mxu0 0
    %1250 = vmatprep.subr.bf16.mxu0 0
    %1251 = vmatpush1.bf16.xpose.msra.mxu0 0
    %1252 = vmatprep.subr.bf16.mxu0 0
    %1253 = vmatpush1.bf16.xpose.msra.mxu0 0
    %1254 = vmatprep.subr.bf16.mxu0 0
    %1255 = vmatpush1.bf16.xpose.msra.mxu0 0
    %1256 = vmatprep.subr.bf16.mxu0 0
    %1257 = vmatpush1.bf16.xpose.msra.mxu0 0
    %1258 = vmatprep.subr.bf16.mxu0 0
    %1259 = vmatpush1.bf16.xpose.msra.mxu0 0
    %1260 = vmatprep.subr.bf16.mxu0 0
    %1261 = vmatpush1.bf16.xpose.msra.mxu0 0
    %1262 = vmatprep.mubr.bf16.mxu0 0
    %1263 = vmatmul.mubr.bf16.gmra.mrb[0].mxu0 %v1225
    %v1264 = vpop.f32.mrb[0].mxu0
    %v1265 = vadd.f32 %v896, %v1264
    %v1266 = vpop.f32.mrb[0].mxu0
    %v1267 = vpop.f32.mrb[0].mxu0
    %v1268 = vpop.f32.mrb[0].mxu0
    %1269 = vdwg.mxu0
    %v1270 = vsel %vm491, %v1265, -inf
    %1271 = vmax.xlane.f32.xlu0 %v1270
    %v1272 = vpop.xlane.xlu0 %1271
    %v1273 = vsub.f32 %v1265, %v1272
    %v1274 = vmul.f32 %v1273, 1.442695
    %v1275 = vpow.pop %v1274
    %v1276 = vsel %vm491, %v1275, 0.0
    %1277 = vadd.xlane.f32.xlu0 %v1276
    %v1278 = vpop.xlane.xlu0 %1277
    %v1279 = vrcp.pop %v1278
    %v1280 = vmul.f32 %v1275, %v1279
    %v1281 = vpack.c.bf16 %v1280, %v1280
    %1282 = vrot.lane.b32.xlu0 %v435, 72
    %v1283 = vpop.permute.xlu0 %1282
    %v1286 = vsel %vm491, %v1281, 0
    %1288 = vmatprep.subr.bf16.mxu0 0
    %1289 = vmatpush1.bf16.msra.mxu0 %v1283
    %1290 = vmatprep.subr.bf16.mxu0 0
    %1291 = vmatpush1.bf16.msra.mxu0 0
    %1292 = vmatprep.subr.bf16.mxu0 0
    %1293 = vmatpush1.bf16.msra.mxu0 0
    %1294 = vmatprep.subr.bf16.mxu0 0
    %1295 = vmatpush1.bf16.msra.mxu0 0
    %1296 = vmatprep.subr.bf16.mxu0 0
    %1297 = vmatpush1.bf16.msra.mxu0 0
    %1298 = vmatprep.subr.bf16.mxu0 0
    %1299 = vmatpush1.bf16.msra.mxu0 0
    %1300 = vmatprep.subr.bf16.mxu0 0
    %1301 = vmatpush1.bf16.msra.mxu0 0
    %1302 = vmatprep.subr.bf16.mxu0 0
    %1303 = vmatpush1.bf16.msra.mxu0 0
    %1304 = vmatprep.subr.bf16.mxu0 0
    %1305 = vmatpush1.bf16.msra.mxu0 0
    %1306 = vmatprep.subr.bf16.mxu0 0
    %1307 = vmatpush1.bf16.msra.mxu0 0
    %1308 = vmatprep.subr.bf16.mxu0 0
    %1309 = vmatpush1.bf16.msra.mxu0 0
    %1310 = vmatprep.subr.bf16.mxu0 0
    %1311 = vmatpush1.bf16.msra.mxu0 0
    %1312 = vmatprep.subr.bf16.mxu0 0
    %1313 = vmatpush1.bf16.msra.mxu0 0
    %1314 = vmatprep.subr.bf16.mxu0 0
    %1315 = vmatpush1.bf16.msra.mxu0 0
    %1316 = vmatprep.subr.bf16.mxu0 0
    %1317 = vmatpush1.bf16.msra.mxu0 0
    %1318 = vmatprep.subr.bf16.mxu0 0
    %1319 = vmatpush1.bf16.msra.mxu0 0
    %1320 = vmatprep.mubr.bf16.mxu0 0
    %1321 = vmatmul.mubr.bf16.gmra.mrb[0].mxu0 %v1286
    %v1322 = vpop.f32.mrb[0].mxu0
    %v1323 = vadd.f32 0.0, %v1322
    %v1324 = vpop.f32.mrb[0].mxu0
    %v1325 = vpop.f32.mrb[0].mxu0
    %v1326 = vpop.f32.mrb[0].mxu0
    %1327 = vdwg.mxu0
    %1329 = vrot.lane.b32.xlu0 %v1107, 8
    %v1330 = vpop.permute.xlu0 %1329
    %1333 = vrot.lane.b32.xlu0 %v1215, 16
    %v1334 = vpop.permute.xlu0 %1333
    %1337 = vrot.lane.b32.xlu0 %v1323, 24
    %v1338 = vpop.permute.xlu0 %1337
    %v1340 = vsel %vm444, %v999, %v1330
    %v1341 = vsel %vm491, %v1340, %v1334
    %v1342 = vsel %vm890, %v1341, %v1338
    %v1343 = vpack.c.bf16 %v1342, %v891
    %v1344 = vld [vmem:[#allocation11] sm:$0xf]
    %v1345 = vld [vmem:[#allocation11 + $0x4] sm:$0xf]
    %v1346 = vld [vmem:[#allocation11 + $0x8] sm:$0xf]
    %v1347 = vld [vmem:[#allocation11 + $0xc] sm:$0xf]
    %v1348 = vld [vmem:[#allocation16] sm:$0x1]
    %v1350 = vlaneseq
    %v1351 = vshrl.u32 %v1350, 7
    %v1352 = vsub.s32 0, %v1351
    %v1353 = vrot.slane %v1348, %v1352
    %v1359 = vunpack.c.l.b16 %v1344
    %v1360 = vunpack.c.l.b16 %v1345
    %v1361 = vunpack.c.l.b16 %v1346
    %v1362 = vunpack.c.l.b16 %v1347
    %v1363 = vpack.c.b16 %v1360, %v1359
    %v1364 = vpack.c.b16 %v1362, %v1361
    %v1368 = vsel %vm300, %v1343, 0
    %1370 = vmatprep.subr.bf16.mxu0 0
    %1371 = vmatpush1.bf16.msra.mxu0 %v1363
    %1372 = vmatprep.subr.bf16.mxu0 0
    %1373 = vmatpush1.bf16.msra.mxu0 %v1364
    %1374 = vmatprep.subr.bf16.mxu0 0
    %1375 = vmatpush1.bf16.msra.mxu0 0
    %1376 = vmatprep.subr.bf16.mxu0 0
    %1377 = vmatpush1.bf16.msra.mxu0 0
    %1378 = vmatprep.subr.bf16.mxu0 0
    %1379 = vmatpush1.bf16.msra.mxu0 0
    %1380 = vmatprep.subr.bf16.mxu0 0
    %1381 = vmatpush1.bf16.msra.mxu0 0
    %1382 = vmatprep.subr.bf16.mxu0 0
    %1383 = vmatpush1.bf16.msra.mxu0 0
    %1384 = vmatprep.subr.bf16.mxu0 0
    %1385 = vmatpush1.bf16.msra.mxu0 0
    %1386 = vmatprep.subr.bf16.mxu0 0
    %1387 = vmatpush1.bf16.msra.mxu0 0
    %1388 = vmatprep.subr.bf16.mxu0 0
    %1389 = vmatpush1.bf16.msra.mxu0 0
    %1390 = vmatprep.subr.bf16.mxu0 0
    %1391 = vmatpush1.bf16.msra.mxu0 0
    %1392 = vmatprep.subr.bf16.mxu0 0
    %1393 = vmatpush1.bf16.msra.mxu0 0
    %1394 = vmatprep.subr.bf16.mxu0 0
    %1395 = vmatpush1.bf16.msra.mxu0 0
    %1396 = vmatprep.subr.bf16.mxu0 0
    %1397 = vmatpush1.bf16.msra.mxu0 0
    %1398 = vmatprep.subr.bf16.mxu0 0
    %1399 = vmatpush1.bf16.msra.mxu0 0
    %1400 = vmatprep.subr.bf16.mxu0 0
    %1401 = vmatpush1.bf16.msra.mxu0 0
    %1402 = vmatprep.mubr.bf16.mxu0 0
    %1403 = vmatmul.mubr.bf16.gmra.mrb[0].mxu0 %v1368
    %v1404 = vpop.f32.mrb[0].mxu0
    %v1405 = vadd.f32 %v1353, %v1404
    %v1406 = vpop.f32.mrb[0].mxu0
    %v1407 = vpop.f32.mrb[0].mxu0
    %v1408 = vadd.f32 %v1353, %v1407
    %v1409 = vpop.f32.mrb[0].mxu0
    %1410 = vdwg.mxu0
    %v1411 = vadd.f32 %v1405, %v270
    %v1412 = vadd.f32 %v1408, %v271
    %v1413 = vsel %vm300, %v1411, 0.0
    %1414 = vadd.xlane.f32.xlu0 %v1413
    %v1415 = vpop.xlane.xlu0 %1414
    %v1416 = vsel %vm300, %v1412, 0.0
    %1417 = vadd.xlane.f32.xlu0 %v1416
    %v1418 = vpop.xlane.xlu0 %1417
    %v1419 = vrcp.pop 32.0
    %v1420 = vmul.f32 %v1415, %v1419
    %v1421 = vmul.f32 %v1418, %v1419
    %v1422 = vsub.f32 %v1411, %v1420
    %v1423 = vsub.f32 %v1412, %v1421
    %v1424 = vmul.f32 %v1422, %v1422
    %v1425 = vmul.f32 %v1423, %v1423
    %v1426 = vsel %vm300, %v1424, 0.0
    %1427 = vadd.xlane.f32.xlu0 %v1426
    %v1428 = vpop.xlane.xlu0 %1427
    %v1429 = vsel %vm300, %v1425, 0.0
    %1430 = vadd.xlane.f32.xlu0 %v1429
    %v1431 = vpop.xlane.xlu0 %1430
    %v1432 = vmul.f32 %v1428, %v1419
    %v1433 = vmul.f32 %v1431, %v1419
    %v1434 = vadd.f32 %v1432, 1e-05
    %v1435 = vadd.f32 %v1433, 1e-05
    %v1436 = vrsqrt.pop %v1434
    %v1437 = vrsqrt.pop %v1435
    %v1438 = vmul.f32 %v1422, %v1436
    %v1439 = vmul.f32 %v1423, %v1437
    %v1440 = vld [vmem:[#allocation17] sm:$0x1]
    %v1442 = vlaneseq
    %v1443 = vshrl.u32 %v1442, 7
    %v1444 = vsub.s32 0, %v1443
    %v1445 = vrot.slane %v1440, %v1444
    %v1447 = vmul.f32 %v1438, %v1445
    %v1448 = vmul.f32 %v1439, %v1445
    %v1449 = vld [vmem:[#allocation19] sm:$0x1]
    %v1451 = vlaneseq
    %v1452 = vshrl.u32 %v1451, 7
    %v1453 = vsub.s32 0, %v1452
    %v1454 = vrot.slane %v1449, %v1453
    %v1456 = vadd.f32 %v1447, %v1454
    %v1457 = vadd.f32 %v1448, %v1454
    %v1458 = vpack.c.bf16 %v1457, %v1456
    %v1459 = vld [vmem:[#allocation20] sm:$0xf]
    %v1460 = vld [vmem:[#allocation20 + $0x4] sm:$0xf]
    %v1461 = vld [vmem:[#allocation20 + $0x8] sm:$0xf]
    %v1462 = vld [vmem:[#allocation20 + $0xc] sm:$0xf]
    %v1463 = vld [vmem:[#allocation22] sm:$0x1]
    %v1465 = vlaneseq
    %v1466 = vshrl.u32 %v1465, 7
    %v1467 = vsub.s32 0, %v1466
    %v1468 = vrot.slane %v1463, %v1467
    %v1474 = vunpack.c.l.b16 %v1459
    %v1475 = vunpack.c.l.b16 %v1460
    %v1476 = vunpack.c.l.b16 %v1461
    %v1477 = vunpack.c.l.b16 %v1462
    %v1478 = vpack.c.b16 %v1475, %v1474
    %v1479 = vpack.c.b16 %v1477, %v1476
    %v1483 = vsel %vm300, %v1458, 0
    %1485 = vmatprep.subr.bf16.mxu0 0
    %1486 = vmatpush1.bf16.msra.mxu0 %v1478
    %1487 = vmatprep.subr.bf16.mxu0 0
    %1488 = vmatpush1.bf16.msra.mxu0 %v1479
    %1489 = vmatprep.subr.bf16.mxu0 0
    %1490 = vmatpush1.bf16.msra.mxu0 0
    %1491 = vmatprep.subr.bf16.mxu0 0
    %1492 = vmatpush1.bf16.msra.mxu0 0
    %1493 = vmatprep.subr.bf16.mxu0 0
    %1494 = vmatpush1.bf16.msra.mxu0 0
    %1495 = vmatprep.subr.bf16.mxu0 0
    %1496 = vmatpush1.bf16.msra.mxu0 0
    %1497 = vmatprep.subr.bf16.mxu0 0
    %1498 = vmatpush1.bf16.msra.mxu0 0
    %1499 = vmatprep.subr.bf16.mxu0 0
    %1500 = vmatpush1.bf16.msra.mxu0 0
    %1501 = vmatprep.subr.bf16.mxu0 0
    %1502 = vmatpush1.bf16.msra.mxu0 0
    %1503 = vmatprep.subr.bf16.mxu0 0
    %1504 = vmatpush1.bf16.msra.mxu0 0
    %1505 = vmatprep.subr.bf16.mxu0 0
    %1506 = vmatpush1.bf16.msra.mxu0 0
    %1507 = vmatprep.subr.bf16.mxu0 0
    %1508 = vmatpush1.bf16.msra.mxu0 0
    %1509 = vmatprep.subr.bf16.mxu0 0
    %1510 = vmatpush1.bf16.msra.mxu0 0
    %1511 = vmatprep.subr.bf16.mxu0 0
    %1512 = vmatpush1.bf16.msra.mxu0 0
    %1513 = vmatprep.subr.bf16.mxu0 0
    %1514 = vmatpush1.bf16.msra.mxu0 0
    %1515 = vmatprep.subr.bf16.mxu0 0
    %1516 = vmatpush1.bf16.msra.mxu0 0
    %1517 = vmatprep.mubr.bf16.mxu0 0
    %1518 = vmatmul.mubr.bf16.gmra.mrb[0].mxu0 %v1483
    %v1519 = vpop.f32.mrb[0].mxu0
    %v1520 = vadd.f32 %v1468, %v1519
    %v1521 = vpop.f32.mrb[0].mxu0
    %v1522 = vpop.f32.mrb[0].mxu0
    %v1523 = vadd.f32 %v1468, %v1522
    %v1524 = vpop.f32.mrb[0].mxu0
    %1525 = vdwg.mxu0
    %v1526 = vxor.u32 %v1520, 2147483648
    %v1527 = vxor.u32 %v1523, 2147483648
    %v1528 = vmul.f32 %v1526, 1.442695
    %v1529 = vpow.pop %v1528
    %v1530 = vmul.f32 %v1527, 1.442695
    %v1531 = vpow.pop %v1530
    %v1532 = vadd.f32 %v1529, 1.0
    %v1533 = vadd.f32 %v1531, 1.0
    %v1534 = vrcp.pop %v1532
    %v1535 = vmul.f32 1.0, %v1534
    %v1536 = vrcp.pop %v1533
    %v1537 = vmul.f32 1.0, %v1536
    %v1538 = vmul.f32 %v1520, %v1535
    %v1539 = vmul.f32 %v1523, %v1537
    %v1540 = vpack.c.bf16 %v1539, %v1538
    %v1541 = vld [vmem:[#allocation23] sm:$0xf]
    %v1542 = vld [vmem:[#allocation23 + $0x4] sm:$0xf]
    %v1543 = vld [vmem:[#allocation23 + $0x8] sm:$0xf]
    %v1544 = vld [vmem:[#allocation23 + $0xc] sm:$0xf]
    %v1545 = vld [vmem:[#allocation23 + $0x10] sm:$0xf]
    %v1546 = vld [vmem:[#allocation23 + $0x14] sm:$0xf]
    %v1547 = vld [vmem:[#allocation23 + $0x18] sm:$0xf]
    %v1548 = vld [vmem:[#allocation23 + $0x1c] sm:$0xf]
    %v1549 = vld [vmem:[#allocation25] sm:$0x1]
    %v1551 = vlaneseq
    %v1552 = vshrl.u32 %v1551, 7
    %v1553 = vsub.s32 0, %v1552
    %v1554 = vrot.slane %v1549, %v1553
    %v1564 = vunpack.c.l.b16 %v1541
    %v1565 = vunpack.c.l.b16 %v1542
    %v1566 = vunpack.c.l.b16 %v1543
    %v1567 = vunpack.c.l.b16 %v1544
    %v1568 = vunpack.c.l.b16 %v1545
    %v1569 = vunpack.c.l.b16 %v1546
    %v1570 = vunpack.c.l.b16 %v1547
    %v1571 = vunpack.c.l.b16 %v1548
    %v1572 = vpack.c.b16 %v1565, %v1564
    %v1573 = vpack.c.b16 %v1567, %v1566
    %v1574 = vpack.c.b16 %v1569, %v1568
    %v1575 = vpack.c.b16 %v1571, %v1570
    %vm1580 = vcmask 523264
    %v1582 = vsel %vm1580, %v1540, 0
    %1584 = vmatprep.subr.bf16.mxu0 0
    %1585 = vmatpush1.bf16.msra.mxu0 %v1572
    %1586 = vmatprep.subr.bf16.mxu0 0
    %1587 = vmatpush1.bf16.msra.mxu0 %v1573
    %1588 = vmatprep.subr.bf16.mxu0 0
    %1589 = vmatpush1.bf16.msra.mxu0 %v1574
    %1590 = vmatprep.subr.bf16.mxu0 0
    %1591 = vmatpush1.bf16.msra.mxu0 %v1575
    %1592 = vmatprep.subr.bf16.mxu0 0
    %1593 = vmatpush1.bf16.msra.mxu0 0
    %1594 = vmatprep.subr.bf16.mxu0 0
    %1595 = vmatpush1.bf16.msra.mxu0 0
    %1596 = vmatprep.subr.bf16.mxu0 0
    %1597 = vmatpush1.bf16.msra.mxu0 0
    %1598 = vmatprep.subr.bf16.mxu0 0
    %1599 = vmatpush1.bf16.msra.mxu0 0
    %1600 = vmatprep.subr.bf16.mxu0 0
    %1601 = vmatpush1.bf16.msra.mxu0 0
    %1602 = vmatprep.subr.bf16.mxu0 0
    %1603 = vmatpush1.bf16.msra.mxu0 0
    %1604 = vmatprep.subr.bf16.mxu0 0
    %1605 = vmatpush1.bf16.msra.mxu0 0
    %1606 = vmatprep.subr.bf16.mxu0 0
    %1607 = vmatpush1.bf16.msra.mxu0 0
    %1608 = vmatprep.subr.bf16.mxu0 0
    %1609 = vmatpush1.bf16.msra.mxu0 0
    %1610 = vmatprep.subr.bf16.mxu0 0
    %1611 = vmatpush1.bf16.msra.mxu0 0
    %1612 = vmatprep.subr.bf16.mxu0 0
    %1613 = vmatpush1.bf16.msra.mxu0 0
    %1614 = vmatprep.subr.bf16.mxu0 0
    %1615 = vmatpush1.bf16.msra.mxu0 0
    %1616 = vmatprep.mubr.bf16.mxu0 0
    %1617 = vmatmul.mubr.bf16.gmra.mrb[0].mxu0 %v1582
    %v1618 = vpop.f32.mrb[0].mxu0
    %v1619 = vadd.f32 %v1554, %v1618
    %v1620 = vpop.f32.mrb[0].mxu0
    %v1621 = vpop.f32.mrb[0].mxu0
    %v1622 = vadd.f32 %v1554, %v1621
    %v1623 = vpop.f32.mrb[0].mxu0
    %1624 = vdwg.mxu0
    %v1625 = vadd.f32 %v1619, %v1456
    %v1626 = vadd.f32 %v1622, %v1457
    %v1627 = vsel %vm300, %v1625, 0.0
    %1628 = vadd.xlane.f32.xlu0 %v1627
    %v1629 = vpop.xlane.xlu0 %1628
    %v1630 = vsel %vm300, %v1626, 0.0
    %1631 = vadd.xlane.f32.xlu0 %v1630
    %v1632 = vpop.xlane.xlu0 %1631
    %v1633 = vmul.f32 %v1629, %v1419
    %v1634 = vmul.f32 %v1632, %v1419
    %v1635 = vsub.f32 %v1625, %v1633
    %v1636 = vsub.f32 %v1626, %v1634
    %v1637 = vmul.f32 %v1635, %v1635
    %v1638 = vmul.f32 %v1636, %v1636
    %v1639 = vsel %vm300, %v1637, 0.0
    %1640 = vadd.xlane.f32.xlu0 %v1639
    %v1641 = vpop.xlane.xlu0 %1640
    %v1642 = vsel %vm300, %v1638, 0.0
    %1643 = vadd.xlane.f32.xlu0 %v1642
    %v1644 = vpop.xlane.xlu0 %1643
    %v1645 = vmul.f32 %v1641, %v1419
    %v1646 = vmul.f32 %v1644, %v1419
    %v1647 = vadd.f32 %v1645, 1e-05
    %v1648 = vadd.f32 %v1646, 1e-05
    %v1649 = vrsqrt.pop %v1647
    %v1650 = vrsqrt.pop %v1648
    %v1651 = vmul.f32 %v1635, %v1649
    %v1652 = vmul.f32 %v1636, %v1650
    %v1653 = vld [vmem:[#allocation26] sm:$0x1]
    %v1655 = vlaneseq
    %v1656 = vshrl.u32 %v1655, 7
    %v1657 = vsub.s32 0, %v1656
    %v1658 = vrot.slane %v1653, %v1657
    %v1660 = vmul.f32 %v1651, %v1658
    %v1661 = vmul.f32 %v1652, %v1658
    %v1662 = vld [vmem:[#allocation28] sm:$0x1]
    %v1664 = vlaneseq
    %v1665 = vshrl.u32 %v1664, 7
    %v1666 = vsub.s32 0, %v1665
    %v1667 = vrot.slane %v1662, %v1666
    %v1669 = vadd.f32 %v1660, %v1667
    %v1670 = vadd.f32 %v1661, %v1667
    %1671 = vst.msk [vmem:[#allocation29] sm:$0xff] %vm300, %v1669
    %1672 = vst.msk [vmem:[#allocation29 + $0x8] sm:$0xff] %vm300, %v1670
    // Predicated region
    $region138: #{tpu_custom_call.1} parent=1 // pred_check
      _
    $region139: #{tpu_custom_call.1} parent=1 // pred_check_branch
      %1674 = sbr.rel (0) target = $region141
    $region140: #{tpu_custom_call.1} parent=1 // pred_region
      %s1676 = ssub.s32 256, 256
      %1677 = vsyncadd [#allocation4], %s1676
      %s1678 = sshll.u32 [#allocation29], 4
      %s1679 = int_to_ptr.vmem [resolvable:$true] %s1678
      %1684 = dma.vmem_to_hbm [thread:$0]  %s1679, 256, %s17, [#allocation4], 128, 128, 8
    $region141: #{tpu_custom_call.1} parent=1 // pred_fallthru
      _
    // Predicated region
    $region142: #{tpu_custom_call.1} parent=1 // pred_check
      _
    $region143: #{tpu_custom_call.1} parent=1 // pred_check_branch
      %1686 = sbr.rel (0) target = $region145
    $region144: #{tpu_custom_call.1} parent=1 // pred_region
      %1687 = dma.done [#allocation4], 256
    $region145: #{tpu_custom_call.1} parent=1 // pred_fallthru
      _
    %1688 = vsyncpa [#allocation3], 1
    %1689 = vsyncpa [#allocation6], 1
    %1690 = vsyncpa [#allocation9], 1
    %1691 = vsyncpa [#allocation12], 1
    %1692 = vsyncpa [#allocation15], 1
    %1693 = vsyncpa [#allocation18], 1
    %1694 = vsyncpa [#allocation21], 1
    %1695 = vsyncpa [#allocation24], 1
    %1696 = vsyncpa [#allocation27], 1
    %1697 = vsyncpa [#allocation4], 1

</llo_original>
